<compile_context>
chip_gen: v5e
topology: v5e:2x2
jax: 0.10.0
libtpu: 0.0.40
codegen_flags: <defaults>
</compile_context>

<pallas_src>
import functools
import math

import jax
import jax.numpy as jnp
from jax import lax
from jax.experimental import pallas as pl
from jax.experimental.pallas import tpu as pltpu

EPS = 1e-5
LANE = 128


def _round_up(x, m):
    return (x + m - 1) // m * m


def _vmem_limit_bytes():
    try:
        cap = int(pltpu.get_tpu_info().vmem_capacity_bytes)
    except Exception:
        cap = 64 * 1024 * 1024
    return min(int(cap * 3 // 4), 100 * 1024 * 1024)


_VMEM_LIMIT = _vmem_limit_bytes()


# ----------------------------- in-kernel helpers -----------------------------

def _maxpool3x3(xs):
    """Separable MaxPool2d(kernel=3, stride=1, padding=1) on (H, W, C) f32."""
    H, W, C = xs.shape
    ninf_w = jnp.full((H, 1, C), -jnp.inf, xs.dtype)
    xw = jnp.concatenate([ninf_w, xs, ninf_w], axis=1)          # (H, W+2, C)
    r = xs                                                      # center tap
    r = jnp.maximum(r, lax.slice(xw, (0, 0, 0), (H, W, C)))
    r = jnp.maximum(r, lax.slice(xw, (0, 2, 0), (H, W + 2, C)))
    ninf_h = jnp.full((1, W, C), -jnp.inf, xs.dtype)
    xh = jnp.concatenate([ninf_h, r, ninf_h], axis=0)           # (H+2, W, C)
    out = r                                                     # center tap
    out = jnp.maximum(out, lax.slice(xh, (0, 0, 0), (H, W, C)))
    out = jnp.maximum(out, lax.slice(xh, (2, 0, 0), (H + 2, W, C)))
    return out


def _conv3x3_rows(t, w9):
    """3x3 conv (padding=1) as 3 accumulating MXU matmuls, one per kernel row.

    t:  (H, W, C) bf16 activations (C a multiple of 128).
    w9: (9*C, Cout) bf16 weights, rows ordered (ky, kx, cin).
    Returns (H*W, Cout) float32.

    Per-ky accumulation keeps only an (H*W, 3*C) patch slab live at a time,
    ~1/3 of full-im2col peak VMEM.
    """
    H, W, C = t.shape
    zc = jnp.zeros((H, 1, C), t.dtype)
    tp = jnp.concatenate([zc, t, zc], axis=1)                   # (H, W+2, C)
    zr = jnp.zeros((1, W + 2, C), t.dtype)
    tp = jnp.concatenate([zr, tp, zr], axis=0)                  # (H+2, W+2, C)
    acc = jnp.zeros((H * W, w9.shape[-1]), jnp.float32)
    for ky in range(3):                                         # static unroll
        rows = lax.slice(tp, (ky, 0, 0), (ky + H, W + 2, C))
        taps = jnp.concatenate(
            [lax.slice(rows, (0, dx, 0), (H, dx + W, C)) for dx in range(3)],
            axis=-1).reshape(H * W, 3 * C)
        acc = acc + jnp.dot(taps, w9[ky * 3 * C:(ky + 1) * 3 * C, :],
                            preferred_element_type=jnp.float32)
    return acc


def _channel_stats(y):
    """(sum, sum-of-squares) over rows of (M, C) f32 -> (2, C)."""
    return jnp.concatenate([jnp.sum(y, axis=0, keepdims=True),
                            jnp.sum(y * y, axis=0, keepdims=True)], axis=0)


# --------------------------------- kernels -----------------------------------

def _kernel_first(x_ref, wf_ref, w4_ref,
                  yf_ref, y4_ref, statsf_ref, stats4_ref, *, H, W):
    """Pass 1: fused first-layer 1x1s + maxpool/1x1 (branch 4), accumulate stats."""
    n = pl.program_id(0)
    Cin = x_ref.shape[-1]
    M = H * W

    xs = x_ref[...].reshape(H, W, Cin)                          # f32
    x2d = xs.reshape(M, Cin).astype(jnp.bfloat16)
    yf = jnp.dot(x2d, wf_ref[...], preferred_element_type=jnp.float32)
    yf_ref[...] = yf.reshape(1, M, yf.shape[-1])

    p = _maxpool3x3(xs).reshape(M, Cin).astype(jnp.bfloat16)    # max in f32
    y4 = jnp.dot(p, w4_ref[...], preferred_element_type=jnp.float32)
    y4_ref[...] = y4.reshape(1, M, y4.shape[-1])

    @pl.when(n == 0)
    def _():
        statsf_ref[...] = jnp.zeros_like(statsf_ref)
        stats4_ref[...] = jnp.zeros_like(stats4_ref)

    statsf_ref[...] += _channel_stats(yf)
    stats4_ref[...] += _channel_stats(y4)


def _kernel_mid(yf_ref, sf_ref, bf_ref, w2b_ref, w3b_ref,
                y1_ref, y2p_ref, t3bp_ref, stats2_ref, stats3b_ref,
                *, H, W, p1, p2r):
    """Pass 2: normalize first layer, b2 3x3 and b3 first 3x3, accumulate stats."""
    n = pl.program_id(0)
    M = H * W
    Pf = yf_ref.shape[-1]

    yf = yf_ref[...].reshape(M, Pf)
    a = jnp.maximum(yf * sf_ref[...] + bf_ref[...], 0.0)        # fused BN+ReLU

    y1_ref[...] = a[:, :p1].reshape(1, M, p1)                   # branch 1 done
    t2 = a[:, p1:p1 + p2r].astype(jnp.bfloat16).reshape(H, W, p2r)
    t3 = a[:, p1 + p2r:].astype(jnp.bfloat16).reshape(H, W, Pf - p1 - p2r)

    y2p = _conv3x3_rows(t2, w2b_ref[...])                       # (M, P2) f32
    t3bp = _conv3x3_rows(t3, w3b_ref[...])                      # (M, P5) f32
    y2p_ref[...] = y2p.reshape(1, M, y2p.shape[-1])
    t3bp_ref[...] = t3bp.reshape(1, M, t3bp.shape[-1])

    @pl.when(n == 0)
    def _():
        stats2_ref[...] = jnp.zeros_like(stats2_ref)
        stats3b_ref[...] = jnp.zeros_like(stats3b_ref)

    stats2_ref[...] += _channel_stats(y2p)
    stats3b_ref[...] += _channel_stats(t3bp)


def _kernel_b3(t3bp_ref, s_ref, b_ref, w3c_ref,
               y3p_ref, stats3_ref, *, H, W):
    """Pass 3: normalize b3 middle BN, second 3x3 conv, accumulate stats."""
    n = pl.program_id(0)
    M = H * W
    C = t3bp_ref.shape[-1]

    t3bp = t3bp_ref[...].reshape(M, C)
    t3b = jnp.maximum(t3bp * s_ref[...] + b_ref[...], 0.0)
    t3b = t3b.astype(jnp.bfloat16).reshape(H, W, C)

    y3p = _conv3x3_rows(t3b, w3c_ref[...])                      # (M, P5) f32
    y3p_ref[...] = y3p.reshape(1, M, y3p.shape[-1])

    @pl.when(n == 0)
    def _():
        stats3_ref[...] = jnp.zeros_like(stats3_ref)

    stats3_ref[...] += _channel_stats(y3p)


def _kernel_final(y1_ref, y2p_ref, y3p_ref, y4p_ref, s_ref, b_ref,
                  out_ref, *, H, W, n1x1, n3x3, n5x5, pool_planes):
    """Pass 4: fused tail BN/ReLU over (y2,y3,y4), slice off lane padding, store."""
    M = H * W
    p2 = y2p_ref.shape[-1]
    p5 = y3p_ref.shape[-1]
    p4 = y4p_ref.shape[-1]

    tailp = jnp.concatenate([y2p_ref[...].reshape(M, p2),       # 128-aligned concat
                             y3p_ref[...].reshape(M, p5),
                             y4p_ref[...].reshape(M, p4)], axis=-1)
    tail = jnp.maximum(tailp * s_ref[...] + b_ref[...], 0.0)
    y1 = y1_ref[...].reshape(M, y1_ref.shape[-1])

    out = jnp.concatenate([y1[:, :n1x1],
                           tail[:, :n3x3],
                           tail[:, p2:p2 + n5x5],
                           tail[:, p2 + p5:p2 + p5 + pool_planes]], axis=-1)
    out_ref[...] = out.reshape(1, H, W, out.shape[-1]).astype(out_ref.dtype)


# ------------------------------ parameter packing -----------------------------

def _pad_cols(a, cpad, fill=0.0):
    c = a.shape[-1]
    if c == cpad:
        return a
    pad_width = [(0, 0)] * (a.ndim - 1) + [(0, cpad - c)]
    return jnp.pad(a, pad_width, constant_values=fill)


def _pack_conv3(w, cin_pad, cout_pad):
    """(3,3,cin,cout) -> (9*cin_pad, cout_pad) bf16 with zero padding."""
    kh, kw, cin, cout = w.shape
    wp = jnp.zeros((kh, kw, cin_pad, cout_pad), jnp.float32)
    wp = wp.at[:, :, :cin, :cout].set(w)
    return wp.reshape(kh * kw * cin_pad, cout_pad).astype(jnp.bfloat16)


def _pack_params(params, dims):
    """Pad channel groups to 128 lanes, fuse shared-input 1x1s, store bf16 weights.

    Conv biases are dropped: training-mode BN's mean subtraction cancels them.
    """
    _, n1x1, n3x3red, n3x3, n5x5red, n5x5, pool_planes = dims
    (w1, _c1, g1, be1,
     w2a, _c2a, g2a, be2a,
     w2b, _c2b, g2b, be2b,
     w3a, _c3a, g3a, be3a,
     w3b, _c3b, g3b, be3b,
     w3c, _c3c, g3c, be3c,
     w4, _c4, g4, be4) = params

    P1 = _round_up(n1x1, LANE)
    P2r = _round_up(n3x3red, LANE)
    P3r = _round_up(n5x5red, LANE)
    P2 = _round_up(n3x3, LANE)
    P5 = _round_up(n5x5, LANE)
    P4 = _round_up(pool_planes, LANE)

    def pad1x1(w, cpad):
        return _pad_cols(w, cpad).astype(jnp.bfloat16)

    def padvec(v, cpad, fill):
        return _pad_cols(v.reshape(1, -1).astype(jnp.float32), cpad, fill)

    packed = dict(
        wf=jnp.concatenate([pad1x1(w1, P1), pad1x1(w2a, P2r), pad1x1(w3a, P3r)], axis=1),
        gf=jnp.concatenate([padvec(g1, P1, 1.0), padvec(g2a, P2r, 1.0),
                            padvec(g3a, P3r, 1.0)], axis=1),
        bf=jnp.concatenate([padvec(be1, P1, 0.0), padvec(be2a, P2r, 0.0),
                            padvec(be3a, P3r, 0.0)], axis=1),
        w2b=_pack_conv3(w2b, P2r, P2),
        w3b=_pack_conv3(w3b, P3r, P5),
        g3b=padvec(g3b, P5, 1.0),
        be3b=padvec(be3b, P5, 0.0),
        w3c=_pack_conv3(w3c, P5, P5),
        w4=pad1x1(w4, P4),
        gt=jnp.concatenate([padvec(g2b, P2, 1.0), padvec(g3c, P5, 1.0),
                            padvec(g4, P4, 1.0)], axis=1),
        bt=jnp.concatenate([padvec(be2b, P2, 0.0), padvec(be3c, P5, 0.0),
                            padvec(be4, P4, 0.0)], axis=1),
    )
    pads = dict(P1=P1, P2r=P2r, P3r=P3r, P2=P2, P5=P5, P4=P4)
    return packed, pads


def _fold_bn(stats, gamma, beta, count):
    """Fold accumulated (sum, sumsq) + gamma/beta into per-channel scale/shift."""
    mean = stats[0:1] / count
    # TODO(synk): one-pass E[x^2]-E[x]^2 can cancel for large-mean activations;
    # switch to a centered two-pass if that regime shows up.
    var = jnp.maximum(stats[1:2] / count - mean * mean, 0.0)
    scale = gamma * lax.rsqrt(var + EPS)
    shift = beta - mean * scale
    return scale, shift


# --------------------------------- wrapper -----------------------------------

def _per_n(M, C):
    return pl.BlockSpec((1, M, C), lambda n: (n, 0, 0))


def _resident(shape):
    nd = len(shape)
    return pl.BlockSpec(shape, lambda *_: (0,) * nd)


def _accum(C):
    return pl.BlockSpec((2, C), lambda n: (0, 0))


def inception_forward(x_nchw, params, dims):
    in_planes, n1x1, n3x3red, n3x3, n5x5red, n5x5, pool_planes = dims
    c_total = n1x1 + n3x3 + n5x5 + pool_planes

    x = jnp.transpose(x_nchw, (0, 2, 3, 1)).astype(jnp.float32)   # NCHW -> NHWC
    N, H, W, Cin = x.shape
    M = H * W
    count = jnp.float32(N * M)

    packed, pads = _pack_params(params, dims)
    P1, P2r, P3r = pads["P1"], pads["P2r"], pads["P3r"]
    P2, P5, P4 = pads["P2"], pads["P5"], pads["P4"]
    Pf = P1 + P2r + P3r
    Pt = P2 + P5 + P4

    cp_arb = pltpu.CompilerParams(dimension_semantics=("arbitrary",),
                                  vmem_limit_bytes=_VMEM_LIMIT)
    cp_par = pltpu.CompilerParams(dimension_semantics=("parallel",),
                                  vmem_limit_bytes=_VMEM_LIMIT)

    # ---- pass 1: fused 1x1s + maxpool/1x1, per-channel stats -----------------
    yf_pre, y4_pre, stats_f, stats_4 = pl.pallas_call(
        functools.partial(_kernel_first, H=H, W=W),
        grid=(N,),
        in_specs=[pl.BlockSpec((1, H, W, Cin), lambda n: (n, 0, 0, 0)),
                  _resident(packed["wf"].shape),
                  _resident(packed["w4"].shape)],
        out_specs=(_per_n(M, Pf), _per_n(M, P4), _accum(Pf), _accum(P4)),
        out_shape=(jax.ShapeDtypeStruct((N, M, Pf), jnp.float32),
                   jax.ShapeDtypeStruct((N, M, P4), jnp.float32),
                   jax.ShapeDtypeStruct((2, Pf), jnp.float32),
                   jax.ShapeDtypeStruct((2, P4), jnp.float32)),
        compiler_params=cp_arb,
    )(x, packed["wf"], packed["w4"])

    scale_f, shift_f = _fold_bn(stats_f, packed["gf"], packed["bf"], count)

    # ---- pass 2: first-layer BN/ReLU, b2 3x3 and b3 first 3x3 ----------------
    y1, y2_pre, t3b_pre, stats_2, stats_3b = pl.pallas_call(
        functools.partial(_kernel_mid, H=H, W=W, p1=P1, p2r=P2r),
        grid=(N,),
        in_specs=[_per_n(M, Pf), _resident((1, Pf)), _resident((1, Pf)),
                  _resident(packed["w2b"].shape), _resident(packed["w3b"].shape)],
        out_specs=(_per_n(M, P1), _per_n(M, P2), _per_n(M, P5),
                   _accum(P2), _accum(P5)),
        out_shape=(jax.ShapeDtypeStruct((N, M, P1), jnp.float32),
                   jax.ShapeDtypeStruct((N, M, P2), jnp.float32),
                   jax.ShapeDtypeStruct((N, M, P5), jnp.float32),
                   jax.ShapeDtypeStruct((2, P2), jnp.float32),
                   jax.ShapeDtypeStruct((2, P5), jnp.float32)),
        compiler_params=cp_arb,
    )(yf_pre, scale_f, shift_f, packed["w2b"], packed["w3b"])

    scale_3b, shift_3b = _fold_bn(stats_3b, packed["g3b"], packed["be3b"], count)

    # ---- pass 3: b3 middle BN/ReLU + second 3x3 -------------------------------
    y3_pre, stats_3 = pl.pallas_call(
        functools.partial(_kernel_b3, H=H, W=W),
        grid=(N,),
        in_specs=[_per_n(M, P5), _resident((1, P5)), _resident((1, P5)),
                  _resident(packed["w3c"].shape)],
        out_specs=(_per_n(M, P5), _accum(P5)),
        out_shape=(jax.ShapeDtypeStruct((N, M, P5), jnp.float32),
                   jax.ShapeDtypeStruct((2, P5), jnp.float32)),
        compiler_params=cp_arb,
    )(t3b_pre, scale_3b, shift_3b, packed["w3c"])

    stats_t = jnp.concatenate([stats_2, stats_3, stats_4], axis=1)
    scale_t, shift_t = _fold_bn(stats_t, packed["gt"], packed["bt"], count)

    # ---- pass 4: fused tail BN/ReLU + concat (parallel -> both TCs on v7x) ---
    out_nhwc = pl.pallas_call(
        functools.partial(_kernel_final, H=H, W=W, n1x1=n1x1, n3x3=n3x3,
                          n5x5=n5x5, pool_planes=pool_planes),
        grid=(N,),
        in_specs=[_per_n(M, P1), _per_n(M, P2), _per_n(M, P5), _per_n(M, P4),
                  _resident((1, Pt)), _resident((1, Pt))],
        out_specs=pl.BlockSpec((1, H, W, c_total), lambda n: (n, 0, 0, 0)),
        out_shape=jax.ShapeDtypeStruct((N, H, W, c_total), jnp.float32),
        compiler_params=cp_par,
    )(y1, y2_pre, y3_pre, y4_pre, scale_t, shift_t)

    return jnp.transpose(out_nhwc, (0, 3, 1, 2))                 # NHWC -> NCHW


# --------------------------- pure-JAX reference -------------------------------

def _ref_conv(x, w, b):
    if w.ndim == 2:  # 1x1 conv stored as (Cin, Cout)
        w = w.reshape(1, 1, *w.shape)
        pad = 'VALID'
    else:            # 3x3 conv stored as (3, 3, Cin, Cout)
        pad = 'SAME'
    y = lax.conv_general_dilated(x, w, (1, 1), pad,
                                 dimension_numbers=('NHWC', 'HWIO', 'NHWC'))
    return y + b


def _ref_bn_relu(y, g, b):
    mean = jnp.mean(y, axis=(0, 1, 2), keepdims=True)
    var = jnp.mean(jnp.square(y - mean), axis=(0, 1, 2), keepdims=True)
    return jnp.maximum((y - mean) * lax.rsqrt(var + EPS) * g + b, 0.0)


def inception_reference(x_nchw, params):
    x = jnp.transpose(x_nchw, (0, 2, 3, 1))
    (w1, c1, g1, be1,
     w2a, c2a, g2a, be2a, w2b, c2b, g2b, be2b,
     w3a, c3a, g3a, be3a, w3b, c3b, g3b, be3b, w3c, c3c, g3c, be3c,
     w4, c4, g4, be4) = params
    y1 = _ref_bn_relu(_ref_conv(x, w1, c1), g1, be1)
    t = _ref_bn_relu(_ref_conv(x, w2a, c2a), g2a, be2a)
    y2 = _ref_bn_relu(_ref_conv(t, w2b, c2b), g2b, be2b)
    t = _ref_bn_relu(_ref_conv(x, w3a, c3a), g3a, be3a)
    t = _ref_bn_relu(_ref_conv(t, w3b, c3b), g3b, be3b)
    y3 = _ref_bn_relu(_ref_conv(t, w3c, c3c), g3c, be3c)
    p = lax.reduce_window(x, -jnp.inf, lax.max, (1, 3, 3, 1), (1, 1, 1, 1), 'SAME')
    y4 = _ref_bn_relu(_ref_conv(p, w4, c4), g4, be4)
    out = jnp.concatenate([y1, y2, y3, y4], axis=-1)
    return jnp.transpose(out, (0, 3, 1, 2))


# ----------------------------- parameter init --------------------------------

def _conv_bn_unit(key, w_shape):
    """Deterministic weights for one Conv+BN unit: (conv_w, conv_b, gamma, beta)."""
    kw, kb, kg, kbe = jax.random.split(key, 4)
    fan_in = math.prod(w_shape[:-1])
    cout = w_shape[-1]
    w = jax.random.normal(kw, w_shape, jnp.float32) * (1.0 / fan_in) ** 0.5
    b = 0.1 * jax.random.normal(kb, (cout,), jnp.float32)
    gamma = 1.0 + 0.1 * jax.random.normal(kg, (cout,), jnp.float32)
    beta = 0.1 * jax.random.normal(kbe, (cout,), jnp.float32)
    return [w, b, gamma, beta]


if __name__ == "__main__":
    # Inception(in_planes=4, n1x1=8, n3x3red=4, n3x3=8, n5x5red=4, n5x5=8, pool_planes=8)
    dims = (4, 8, 4, 8, 4, 8, 8)
    in_planes, n1x1, n3x3red, n3x3, n5x5red, n5x5, pool_planes = dims
    c_total = n1x1 + n3x3 + n5x5 + pool_planes

    key = jax.random.PRNGKey(0)
    kx, kp = jax.random.split(key)
    x = jax.random.normal(kx, (2, in_planes, 16, 16), jnp.float32)  # NCHW, like PyTorch

    ks = jax.random.split(kp, 7)
    params = []
    params += _conv_bn_unit(ks[0], (in_planes, n1x1))          # b1
    params += _conv_bn_unit(ks[1], (in_planes, n3x3red))       # b2 reduce
    params += _conv_bn_unit(ks[2], (3, 3, n3x3red, n3x3))      # b2 3x3
    params += _conv_bn_unit(ks[3], (in_planes, n5x5red))       # b3 reduce
    params += _conv_bn_unit(ks[4], (3, 3, n5x5red, n5x5))      # b3 3x3 (1st)
    params += _conv_bn_unit(ks[5], (3, 3, n5x5, n5x5))         # b3 3x3 (2nd)
    params += _conv_bn_unit(ks[6], (in_planes, pool_planes))   # b4

    out = inception_forward(x, params, dims)
    out = jax.block_until_ready(out)

    assert out.shape == (2, c_total, 16, 16)
    ref = inception_reference(x, params)
    max_err = float(jnp.max(jnp.abs(out - ref)))
    # bf16 MXU operands (f32 accumulation) -> slightly looser tolerance vs f32 ref.
    assert jnp.allclose(out, ref, rtol=5e-2, atol=5e-2), f"max abs err {max_err}"

    print("KERNEL_OK")
</pallas_src>

<mosaic_0001>
module attributes {stable_mosaic.version = 11 : i64} {
  func.func @_kernel_first(%arg0: i32, %arg1: memref<1x16x16x4xf32, #tpu.memory_space<vmem>>, %arg2: memref<4x384xbf16, #tpu.memory_space<vmem>>, %arg3: memref<4x128xbf16, #tpu.memory_space<vmem>>, %arg4: memref<1x256x384xf32, #tpu.memory_space<vmem>>, %arg5: memref<1x256x128xf32, #tpu.memory_space<vmem>>, %arg6: memref<2x384xf32, #tpu.memory_space<vmem>>, %arg7: memref<2x128xf32, #tpu.memory_space<vmem>>) attributes {dimension_semantics = [#tpu.dimension_semantics<arbitrary>], iteration_bounds = array<i64: 2>, scalar_prefetch = 0 : i64, scratch_operands = 0 : i64, tpu.core_type = #tpu.core_type<tc>, window_params = [{transform_indices = @transform_0, window_bounds = array<i64: 1, 16, 16, 4>}, {pipeline_mode = #tpu.pipeline_mode<synchronous>, transform_indices = @transform_1, window_bounds = array<i64: 4, 384>}, {pipeline_mode = #tpu.pipeline_mode<synchronous>, transform_indices = @transform_2, window_bounds = array<i64: 4, 128>}, {transform_indices = @transform_3, window_bounds = array<i64: 1, 256, 384>}, {transform_indices = @transform_4, window_bounds = array<i64: 1, 256, 128>}, {pipeline_mode = #tpu.pipeline_mode<synchronous>, transform_indices = @transform_5, window_bounds = array<i64: 2, 384>}, {pipeline_mode = #tpu.pipeline_mode<synchronous>, transform_indices = @transform_6, window_bounds = array<i64: 2, 128>}]} {
    %c0 = arith.constant 0 : index
    %c0_0 = arith.constant 0 : index
    %c0_1 = arith.constant 0 : index
    %c0_2 = arith.constant 0 : index
    %0 = vector.load %arg1[%c0, %c0_0, %c0_1, %c0_2] : memref<1x16x16x4xf32, #tpu.memory_space<vmem>>, vector<1x16x16x4xf32>
    %1 = vector.shape_cast %0 : vector<1x16x16x4xf32> to vector<16x16x4xf32>
    %2 = vector.shape_cast %1 : vector<16x16x4xf32> to vector<256x4xf32>
    %3 = arith.truncf %2 : vector<256x4xf32> to vector<256x4xbf16>
    %c0_3 = arith.constant 0 : index
    %c0_4 = arith.constant 0 : index
    %4 = vector.load %arg2[%c0_3, %c0_4] : memref<4x384xbf16, #tpu.memory_space<vmem>>, vector<4x384xbf16>
    %cst = arith.constant dense<0.000000e+00> : vector<256x384xf32>
    %5 = tpu.matmul %3, %4, %cst {dimension_numbers = #tpu.dot_dimension_numbers<[1], [0], [0], [1], [0, 0, 1, 1], [], []>} : vector<256x4xbf16>, vector<4x384xbf16>, vector<256x384xf32> -> vector<256x384xf32>
    %6 = vector.shape_cast %5 : vector<256x384xf32> to vector<1x256x384xf32>
    %c0_5 = arith.constant 0 : index
    %c0_6 = arith.constant 0 : index
    %c0_7 = arith.constant 0 : index
    %7 = vector.load %arg4[%c0_5, %c0_6, %c0_7] : memref<1x256x384xf32, #tpu.memory_space<vmem>>, vector<1x256x384xf32>
    tpu.vector_store %arg4[%c0_5, %c0_6, %c0_7], %6 {strides = array<i32>} : memref<1x256x384xf32, #tpu.memory_space<vmem>>, vector<1x256x384xf32>,
    %cst_8 = arith.constant 0xFF800000 : f32
    %8 = vector.broadcast %cst_8 : f32 to vector<16x1x4xf32>
    %9 = tpu.concatenate %8, %1, %8 in 1 : vector<16x1x4xf32>, vector<16x16x4xf32>, vector<16x1x4xf32> -> vector<16x18x4xf32>
    %10 = vector.extract_strided_slice %9 {offsets = [0, 0, 0], sizes = [16, 16, 4], strides = [1, 1, 1]} : vector<16x18x4xf32> to vector<16x16x4xf32>
    %11 = arith.maximumf %1, %10 : vector<16x16x4xf32>
    %12 = vector.extract_strided_slice %9 {offsets = [0, 2, 0], sizes = [16, 16, 4], strides = [1, 1, 1]} : vector<16x18x4xf32> to vector<16x16x4xf32>
    %13 = arith.maximumf %11, %12 : vector<16x16x4xf32>
    %cst_9 = arith.constant 0xFF800000 : f32
    %14 = vector.broadcast %cst_9 : f32 to vector<1x16x4xf32>
    %15 = tpu.concatenate %14, %13, %14 in 0 : vector<1x16x4xf32>, vector<16x16x4xf32>, vector<1x16x4xf32> -> vector<18x16x4xf32>
    %16 = vector.extract_strided_slice %15 {offsets = [0, 0, 0], sizes = [16, 16, 4], strides = [1, 1, 1]} : vector<18x16x4xf32> to vector<16x16x4xf32>
    %17 = arith.maximumf %13, %16 : vector<16x16x4xf32>
    %18 = vector.extract_strided_slice %15 {offsets = [2, 0, 0], sizes = [16, 16, 4], strides = [1, 1, 1]} : vector<18x16x4xf32> to vector<16x16x4xf32>
    %19 = arith.maximumf %17, %18 : vector<16x16x4xf32>
    %20 = vector.shape_cast %19 : vector<16x16x4xf32> to vector<256x4xf32>
    %21 = arith.truncf %20 : vector<256x4xf32> to vector<256x4xbf16>
    %c0_10 = arith.constant 0 : index
    %c0_11 = arith.constant 0 : index
    %22 = vector.load %arg3[%c0_10, %c0_11] : memref<4x128xbf16, #tpu.memory_space<vmem>>, vector<4x128xbf16>
    %cst_12 = arith.constant dense<0.000000e+00> : vector<256x128xf32>
    %23 = tpu.matmul %21, %22, %cst_12 {dimension_numbers = #tpu.dot_dimension_numbers<[1], [0], [0], [1], [0, 0, 1, 1], [], []>} : vector<256x4xbf16>, vector<4x128xbf16>, vector<256x128xf32> -> vector<256x128xf32>
    %24 = vector.shape_cast %23 : vector<256x128xf32> to vector<1x256x128xf32>
    %c0_13 = arith.constant 0 : index
    %c0_14 = arith.constant 0 : index
    %c0_15 = arith.constant 0 : index
    %25 = vector.load %arg5[%c0_13, %c0_14, %c0_15] : memref<1x256x128xf32, #tpu.memory_space<vmem>>, vector<1x256x128xf32>
    tpu.vector_store %arg5[%c0_13, %c0_14, %c0_15], %24 {strides = array<i32>} : memref<1x256x128xf32, #tpu.memory_space<vmem>>, vector<1x256x128xf32>,
    %c0_i32 = arith.constant 0 : i32
    %26 = arith.cmpi eq, %arg0, %c0_i32 : i32
    %27 = arith.extui %26 : i1 to i32
    %c0_i32_16 = arith.constant 0 : i32
    %28 = arith.cmpi ne, %27, %c0_i32_16 : i32
    scf.if %28 {
      %cst_29 = arith.constant 0.000000e+00 : f32
      %47 = vector.broadcast %cst_29 : f32 to vector<2x384xf32>
      %c0_30 = arith.constant 0 : index
      %c0_31 = arith.constant 0 : index
      %48 = vector.load %arg6[%c0_30, %c0_31] : memref<2x384xf32, #tpu.memory_space<vmem>>, vector<2x384xf32>
      tpu.vector_store %arg6[%c0_30, %c0_31], %47 {strides = array<i32>} : memref<2x384xf32, #tpu.memory_space<vmem>>, vector<2x384xf32>,
      %cst_32 = arith.constant 0.000000e+00 : f32
      %49 = vector.broadcast %cst_32 : f32 to vector<2x128xf32>
      %c0_33 = arith.constant 0 : index
      %c0_34 = arith.constant 0 : index
      %50 = vector.load %arg7[%c0_33, %c0_34] : memref<2x128xf32, #tpu.memory_space<vmem>>, vector<2x128xf32>
      tpu.vector_store %arg7[%c0_33, %c0_34], %49 {strides = array<i32>} : memref<2x128xf32, #tpu.memory_space<vmem>>, vector<2x128xf32>,
    } else {
    }
    %c0_17 = arith.constant 0 : index
    %c0_18 = arith.constant 0 : index
    %29 = vector.load %arg6[%c0_17, %c0_18] : memref<2x384xf32, #tpu.memory_space<vmem>>, vector<2x384xf32>
    %cst_19 = arith.constant dense<0.000000e+00> : vector<384xf32>
    %30 = vector.multi_reduction <add>, %5, %cst_19 [0] : vector<256x384xf32> to vector<384xf32>
    %31 = vector.shape_cast %30 : vector<384xf32> to vector<1x384xf32>
    %32 = arith.mulf %5, %5 : vector<256x384xf32>
    %cst_20 = arith.constant dense<0.000000e+00> : vector<384xf32>
    %33 = vector.multi_reduction <add>, %32, %cst_20 [0] : vector<256x384xf32> to vector<384xf32>
    %34 = vector.shape_cast %33 : vector<384xf32> to vector<1x384xf32>
    %35 = tpu.concatenate %31, %34 in 0 : vector<1x384xf32>, vector<1x384xf32> -> vector<2x384xf32>
    %36 = arith.addf %29, %35 : vector<2x384xf32>
    %c0_21 = arith.constant 0 : index
    %c0_22 = arith.constant 0 : index
    %37 = vector.load %arg6[%c0_21, %c0_22] : memref<2x384xf32, #tpu.memory_space<vmem>>, vector<2x384xf32>
    tpu.vector_store %arg6[%c0_21, %c0_22], %36 {strides = array<i32>} : memref<2x384xf32, #tpu.memory_space<vmem>>, vector<2x384xf32>,
    %c0_23 = arith.constant 0 : index
    %c0_24 = arith.constant 0 : index
    %38 = vector.load %arg7[%c0_23, %c0_24] : memref<2x128xf32, #tpu.memory_space<vmem>>, vector<2x128xf32>
    %cst_25 = arith.constant dense<0.000000e+00> : vector<128xf32>
    %39 = vector.multi_reduction <add>, %23, %cst_25 [0] : vector<256x128xf32> to vector<128xf32>
    %40 = vector.shape_cast %39 : vector<128xf32> to vector<1x128xf32>
    %41 = arith.mulf %23, %23 : vector<256x128xf32>
    %cst_26 = arith.constant dense<0.000000e+00> : vector<128xf32>
    %42 = vector.multi_reduction <add>, %41, %cst_26 [0] : vector<256x128xf32> to vector<128xf32>
    %43 = vector.shape_cast %42 : vector<128xf32> to vector<1x128xf32>
    %44 = tpu.concatenate %40, %43 in 0 : vector<1x128xf32>, vector<1x128xf32> -> vector<2x128xf32>
    %45 = arith.addf %38, %44 : vector<2x128xf32>
    %c0_27 = arith.constant 0 : index
    %c0_28 = arith.constant 0 : index
    %46 = vector.load %arg7[%c0_27, %c0_28] : memref<2x128xf32, #tpu.memory_space<vmem>>, vector<2x128xf32>
    tpu.vector_store %arg7[%c0_27, %c0_28], %45 {strides = array<i32>} : memref<2x128xf32, #tpu.memory_space<vmem>>, vector<2x128xf32>,
    return
  }
  func.func @transform_0(%arg0: i32) -> (i32, i32, i32, i32) {
    %c0_i32 = arith.constant 0 : i32
    %c0_i32_0 = arith.constant 0 : i32
    %c0_i32_1 = arith.constant 0 : i32
    %c0_i32_2 = arith.constant 0 : i32
    return %arg0, %c0_i32, %c0_i32_0, %c0_i32_1 : i32, i32, i32, i32
  }
  func.func @transform_1(%arg0: i32) -> (i32, i32) {
    %c0_i32 = arith.constant 0 : i32
    %c0_i32_0 = arith.constant 0 : i32
    %c0_i32_1 = arith.constant 0 : i32
    return %c0_i32, %c0_i32_0 : i32, i32
  }
  func.func @transform_2(%arg0: i32) -> (i32, i32) {
    %c0_i32 = arith.constant 0 : i32
    %c0_i32_0 = arith.constant 0 : i32
    %c0_i32_1 = arith.constant 0 : i32
    return %c0_i32, %c0_i32_0 : i32, i32
  }
  func.func @transform_3(%arg0: i32) -> (i32, i32, i32) {
    %c0_i32 = arith.constant 0 : i32
    %c0_i32_0 = arith.constant 0 : i32
    %c0_i32_1 = arith.constant 0 : i32
    return %arg0, %c0_i32, %c0_i32_0 : i32, i32, i32
  }
  func.func @transform_4(%arg0: i32) -> (i32, i32, i32) {
    %c0_i32 = arith.constant 0 : i32
    %c0_i32_0 = arith.constant 0 : i32
    %c0_i32_1 = arith.constant 0 : i32
    return %arg0, %c0_i32, %c0_i32_0 : i32, i32, i32
  }
  func.func @transform_5(%arg0: i32) -> (i32, i32) {
    %c0_i32 = arith.constant 0 : i32
    %c0_i32_0 = arith.constant 0 : i32
    %c0_i32_1 = arith.constant 0 : i32
    return %c0_i32, %c0_i32_0 : i32, i32
  }
  func.func @transform_6(%arg0: i32) -> (i32, i32) {
    %c0_i32 = arith.constant 0 : i32
    %c0_i32_0 = arith.constant 0 : i32
    %c0_i32_1 = arith.constant 0 : i32
    return %c0_i32, %c0_i32_0 : i32, i32
  }
}

</mosaic_0001>

<llo_original>
// kernel: tpu_custom_call.1
$region0: #{tpu_custom_call.1}
  #allocation0 [shape = 'u32[]', space=smem, size = 0x4, offset = 0x4, fixed_abs, tag = 'smem constant byte address 0x4 - core index']
  #allocation1 [shape = 'u32[72,128]{1,0:T(1,128)}', space=vmem, size = 0x9000, scoped, tag = 'internal scratch']
  %s0 = inlined_call_operand.vmem [shape: f32[2,16,16,4], index: 0, kind: input, shape index: {}]
  %s1 = inlined_call_operand.vmem [shape: bf16[4,384], index: 1, kind: input, shape index: {}]
  %s2 = inlined_call_operand.vmem [shape: bf16[4,128], index: 2, kind: input, shape index: {}]
  %s3 = inlined_call_operand.hbm [shape: f32[2,256,384], index: 3, kind: output, shape index: {0}]
  %s4 = inlined_call_operand.hbm [shape: f32[2,256,128], index: 4, kind: output, shape index: {1}]
  %s5 = inlined_call_operand.hbm [shape: f32[2,384], index: 5, kind: output, shape index: {2}]
  %s6 = inlined_call_operand.hbm [shape: f32[2,128], index: 6, kind: output, shape index: {3}]
  %7 = xla_tuple %s3, %s4, %s5, %s6
  %s8 = sld [smem:[#allocation0]]
  $region73: #{tpu_custom_call.1} parent=0
    _
  %s10 = ssub.s32 1, %s8
  %s11 = scalar_select 0, %s10, %s8
  $region1: #{tpu_custom_call.1} parent=0
    #allocation2 [shape = 'u8[786432]{0}', space=vmem, size = 0xc0000, scoped, tag = 'output window, operand 0']
    #allocation3 [shape = 's32[2]{0}', space=sflag, size = 0x8, scoped, tag = 'scoped memory for tpu_custom_call.1']
    #allocation4 [shape = 'u8[262144]{0}', space=vmem, size = 0x40000, scoped, tag = 'output window, operand 1']
    #allocation5 [shape = 's32[2]{0}', space=sflag, size = 0x8, scoped, tag = 'scoped memory for tpu_custom_call.1']
    #allocation6 [shape = 'u8[3072]{0}', space=vmem, size = 0xc00, scoped, tag = 'output window, operand 2, single buffered']
    #allocation7 [shape = 'u8[1024]{0}', space=vmem, size = 0x400, scoped, tag = 'output window, operand 3, single buffered']
    #allocation8 [shape = 's32[1]{0}', space=sflag, size = 0x4, scoped, tag = 'scoped memory for tpu_custom_call.1']
    %12 = vsyncpa [#allocation3], 0
    %s13 = scalar_lea.sflag [#allocation3], 1
    %14 = vsyncpa %s13, 0
    %15 = vsyncpa [#allocation5], 0
    %s16 = scalar_lea.sflag [#allocation5], 1
    %17 = vsyncpa %s16, 0
    %18 = vsyncpa [#allocation8], 0
    loop: start=0, step=1, limit=4
    $region2: #{tpu_custom_call.1} parent=1 // loop_pre_header
      _
    $region3: #{tpu_custom_call.1} parent=1 // loop_header
      %s20 = sphi 0, %s24
      %p21 = scmp.ge.s32.totalorder %s20, 4
      %s30 = sphi 0, %s32
      %s33 = sphi 0, %s30
      %s34 = sphi 0, %s33
      %s50 = sphi 0, %s34
      %s54 = sphi 0, %s54
      %s56 = sphi 0, %s54
      %s57 = sphi 0, %s56
      %s71 = sphi 0, %s57
      %s75 = sphi 0, %s75
      %s77 = sphi 0, %s75
      %s78 = sphi 0, %s77
      %s92 = sphi 0, %s78
      %s98 = sphi 0, %s100
      %s101 = sphi 0, %s98
      %s102 = sphi 0, %s101
      %s118 = sphi 0, %s102
      %s124 = sphi 0, %s126
      %s127 = sphi 0, %s124
      %s128 = sphi 0, %s127
      %s144 = sphi 0, %s128
      %s148 = sphi 0, %s148
      %s150 = sphi 0, %s148
      %s151 = sphi 0, %s150
      %s165 = sphi 0, %s151
      %s169 = sphi 0, %s169
      %s171 = sphi 0, %s169
      %s172 = sphi 0, %s171
      %s186 = sphi 0, %s172
    $region4: #{tpu_custom_call.1} parent=1 // loop_header_branch
      %23 = sbr.rel (%p21) target = $region8
    $region5: #{tpu_custom_call.1} parent=1 // loop_body
      %s25 = ssub.s32 %s20, 1
      %s26 = ssub.s32 %s20, 2
      %s27 = sadd.s32 %s20, 1
      %s28 = ssub.s32 %s20, %s27
      %p29 = scmp.eq.s32.totalorder %s28, 0
      %s31 = sadd.s32 %s30, 1
      %s32 = scalar_select %p29, %s30, %s31
      %p35 = pneg %p29
      %p36 = scmp.eq.s32.totalorder %s20, 1
      %p37 = por %p35, %p36
      %p38 = scmp.ne.s32.totalorder %s30, %s33
      %p39 = scmp.eq.s32.totalorder %s20, 0
      %p40 = por %p38, %p39
      %p41 = scmp.ne.s32.totalorder %s30, %s33
      %p42 = scmp.eq.s32.totalorder %s25, 1
      %p43 = por %p41, %p42
      %p44 = scmp.ne.s32.totalorder %s33, %s34
      %p45 = scmp.eq.s32.totalorder %s25, 0
      %p46 = por %p44, %p45
      %p47 = scmp.ne.s32.totalorder %s33, %s34
      %p48 = scmp.eq.s32.totalorder %s26, 1
      %p49 = por %p47, %p48
      %p51 = scmp.ne.s32.totalorder %s34, %s50
      %p52 = scmp.eq.s32.totalorder %s26, 0
      %p53 = por %p51, %p52
      %s55 = sadd.s32 %s54, 1
      %p58 = scmp.eq.s32.totalorder %s20, 1
      %p59 = scmp.ne.s32.totalorder %s54, %s56
      %p60 = scmp.eq.s32.totalorder %s20, 0
      %p61 = por %p59, %p60
      %p62 = scmp.ne.s32.totalorder %s54, %s56
      %p63 = scmp.eq.s32.totalorder %s25, 1
      %p64 = por %p62, %p63
      %p65 = scmp.ne.s32.totalorder %s56, %s57
      %p66 = scmp.eq.s32.totalorder %s25, 0
      %p67 = por %p65, %p66
      %p68 = scmp.ne.s32.totalorder %s56, %s57
      %p69 = scmp.eq.s32.totalorder %s26, 1
      %p70 = por %p68, %p69
      %p72 = scmp.ne.s32.totalorder %s57, %s71
      %p73 = scmp.eq.s32.totalorder %s26, 0
      %p74 = por %p72, %p73
      %s76 = sadd.s32 %s75, 1
      %p79 = scmp.eq.s32.totalorder %s20, 1
      %p80 = scmp.ne.s32.totalorder %s75, %s77
      %p81 = scmp.eq.s32.totalorder %s20, 0
      %p82 = por %p80, %p81
      %p83 = scmp.ne.s32.totalorder %s75, %s77
      %p84 = scmp.eq.s32.totalorder %s25, 1
      %p85 = por %p83, %p84
      %p86 = scmp.ne.s32.totalorder %s77, %s78
      %p87 = scmp.eq.s32.totalorder %s25, 0
      %p88 = por %p86, %p87
      %p89 = scmp.ne.s32.totalorder %s77, %s78
      %p90 = scmp.eq.s32.totalorder %s26, 1
      %p91 = por %p89, %p90
      %p93 = scmp.ne.s32.totalorder %s78, %s92
      %p94 = scmp.eq.s32.totalorder %s26, 0
      %p95 = por %p93, %p94
      %s96 = ssub.s32 %s20, %s27
      %p97 = scmp.eq.s32.totalorder %s96, 0
      %s99 = sadd.s32 %s98, 1
      %s100 = scalar_select %p97, %s98, %s99
      %p103 = pneg %p97
      %p104 = scmp.eq.s32.totalorder %s20, 1
      %p105 = por %p103, %p104
      %p106 = scmp.ne.s32.totalorder %s98, %s101
      %p107 = scmp.eq.s32.totalorder %s20, 0
      %p108 = por %p106, %p107
      %p109 = scmp.ne.s32.totalorder %s98, %s101
      %p110 = scmp.eq.s32.totalorder %s25, 1
      %p111 = por %p109, %p110
      %p112 = scmp.ne.s32.totalorder %s101, %s102
      %p113 = scmp.eq.s32.totalorder %s25, 0
      %p114 = por %p112, %p113
      %p115 = scmp.ne.s32.totalorder %s101, %s102
      %p116 = scmp.eq.s32.totalorder %s26, 1
      %p117 = por %p115, %p116
      %p119 = scmp.ne.s32.totalorder %s102, %s118
      %p120 = scmp.eq.s32.totalorder %s26, 0
      %p121 = por %p119, %p120
      %s122 = ssub.s32 %s20, %s27
      %p123 = scmp.eq.s32.totalorder %s122, 0
      %s125 = sadd.s32 %s124, 1
      %s126 = scalar_select %p123, %s124, %s125
      %p129 = pneg %p123
      %p130 = scmp.eq.s32.totalorder %s20, 1
      %p131 = por %p129, %p130
      %p132 = scmp.ne.s32.totalorder %s124, %s127
      %p133 = scmp.eq.s32.totalorder %s20, 0
      %p134 = por %p132, %p133
      %p135 = scmp.ne.s32.totalorder %s124, %s127
      %p136 = scmp.eq.s32.totalorder %s25, 1
      %p137 = por %p135, %p136
      %p138 = scmp.ne.s32.totalorder %s127, %s128
      %p139 = scmp.eq.s32.totalorder %s25, 0
      %p140 = por %p138, %p139
      %p141 = scmp.ne.s32.totalorder %s127, %s128
      %p142 = scmp.eq.s32.totalorder %s26, 1
      %p143 = por %p141, %p142
      %p145 = scmp.ne.s32.totalorder %s128, %s144
      %p146 = scmp.eq.s32.totalorder %s26, 0
      %p147 = por %p145, %p146
      %s149 = sadd.s32 %s148, 1
      %p152 = scmp.eq.s32.totalorder %s20, 1
      %p153 = scmp.ne.s32.totalorder %s148, %s150
      %p154 = scmp.eq.s32.totalorder %s20, 0
      %p155 = por %p153, %p154
      %p156 = scmp.ne.s32.totalorder %s148, %s150
      %p157 = scmp.eq.s32.totalorder %s25, 1
      %p158 = por %p156, %p157
      %p159 = scmp.ne.s32.totalorder %s150, %s151
      %p160 = scmp.eq.s32.totalorder %s25, 0
      %p161 = por %p159, %p160
      %p162 = scmp.ne.s32.totalorder %s150, %s151
      %p163 = scmp.eq.s32.totalorder %s26, 1
      %p164 = por %p162, %p163
      %p166 = scmp.ne.s32.totalorder %s151, %s165
      %p167 = scmp.eq.s32.totalorder %s26, 0
      %p168 = por %p166, %p167
      %s170 = sadd.s32 %s169, 1
      %p173 = scmp.eq.s32.totalorder %s20, 1
      %p174 = scmp.ne.s32.totalorder %s169, %s171
      %p175 = scmp.eq.s32.totalorder %s20, 0
      %p176 = por %p174, %p175
      %p177 = scmp.ne.s32.totalorder %s169, %s171
      %p178 = scmp.eq.s32.totalorder %s25, 1
      %p179 = por %p177, %p178
      %p180 = scmp.ne.s32.totalorder %s171, %s172
      %p181 = scmp.eq.s32.totalorder %s25, 0
      %p182 = por %p180, %p181
      %p183 = scmp.ne.s32.totalorder %s171, %s172
      %p184 = scmp.eq.s32.totalorder %s26, 1
      %p185 = por %p183, %p184
      %p187 = scmp.ne.s32.totalorder %s172, %s186
      %p188 = scmp.eq.s32.totalorder %s26, 0
      %p189 = por %p187, %p188
      %p190 = scmp.le.s32.totalorder 1, %s20
      %p191 = scmp.lt.s32.totalorder %s20, 3
      %p192 = pnand %p190, %p191
      %p193 = pneg %p192
      // Predicated region
      $region9: #{tpu_custom_call.1} parent=5 // pred_check
        _
      $region10: #{tpu_custom_call.1} parent=5 // pred_check_branch
        %195 = sbr.rel (%p192) target = $region12
      $region11: #{tpu_custom_call.1} parent=5 // pred_region
        %s196 = ssub.s32 %s20, 1
        // Predicated region
        $region13: #{tpu_custom_call.1} parent=11 // pred_check
          %p197 = pneg %p67
        $region14: #{tpu_custom_call.1} parent=11 // pred_check_branch
          %199 = sbr.rel (%p197) target = $region16
        $region15: #{tpu_custom_call.1} parent=11 // pred_region
          _
        $region16: #{tpu_custom_call.1} parent=11 // pred_fallthru
          _
        // Predicated region
        $region17: #{tpu_custom_call.1} parent=11 // pred_check
          %p200 = pneg %p88
        $region18: #{tpu_custom_call.1} parent=11 // pred_check_branch
          %202 = sbr.rel (%p200) target = $region20
        $region19: #{tpu_custom_call.1} parent=11 // pred_region
          _
        $region20: #{tpu_custom_call.1} parent=11 // pred_fallthru
          _
      $region12: #{tpu_custom_call.1} parent=5 // pred_fallthru
        _
      %p203 = scmp.lt.s32.totalorder %s20, 2
      // Predicated region
      $region21: #{tpu_custom_call.1} parent=5 // pred_check
        %p204 = pneg %p203
      $region22: #{tpu_custom_call.1} parent=5 // pred_check_branch
        %206 = sbr.rel (%p204) target = $region24
      $region23: #{tpu_custom_call.1} parent=5 // pred_region
        // Predicated region
        $region25: #{tpu_custom_call.1} parent=23 // pred_check
          %p207 = pneg %p40
        $region26: #{tpu_custom_call.1} parent=23 // pred_check_branch
          %209 = sbr.rel (%p207) target = $region28
        $region27: #{tpu_custom_call.1} parent=23 // pred_region
          %p210 = scmp.lt.s32.totalorder %s20, 1
          %s211 = scalar_select %p210, %s20, 1
          %s212 = smul.addr %s211, 32
          %s213 = smul.addr %s212, 8
          %s214 = scalar_lea.vmem %s0, %s213
        $region28: #{tpu_custom_call.1} parent=23 // pred_fallthru
          _
      $region24: #{tpu_custom_call.1} parent=5 // pred_fallthru
        _
      %p215 = scmp.le.s32.totalorder 1, %s20
      %p216 = scmp.lt.s32.totalorder %s20, 3
      %p217 = pnand %p215, %p216
      %p218 = pneg %p217
      // Predicated region
      $region29: #{tpu_custom_call.1} parent=5 // pred_check
        _
      $region30: #{tpu_custom_call.1} parent=5 // pred_check_branch
        %220 = sbr.rel (%p217) target = $region32
      $region31: #{tpu_custom_call.1} parent=5 // pred_region
        %s221 = ssub.s32 %s20, 1
        %p222 = scmp.lt.s32.totalorder %s25, 1
        %s223 = scalar_select %p222, %s25, 1
        %s224 = smul.addr %s223, 32
        %s225 = smul.addr %s224, 8
        %s226 = scalar_lea.vmem %s0, %s225
        %p227 = pneg %p46
        %p228 = pneg %p43
        %p229 = pneg %p67
        %p230 = pneg %p64
        %p231 = pneg %p88
        %p232 = pneg %p85
        %p233 = pneg %p114
        %p234 = pneg %p111
        %s235 = sand.u32 %s101, 1
        %s236 = scalar_lea.sflag [#allocation3], %s235
        %s237 = sand.u32 %s101, 1
        %s238 = smul.addr %s237, 768
        %s239 = scalar_lea.vmem [#allocation2], %s238
        %p240 = pneg %p140
        %p241 = pneg %p137
        %s242 = sand.u32 %s25, 1
        %s243 = scalar_lea.sflag [#allocation5], %s242
        %s244 = sand.u32 %s127, 1
        %s245 = smul.addr %s244, 256
        %s246 = scalar_lea.vmem [#allocation4], %s245
        %p247 = pneg %p161
        %p248 = pneg %p158
        %p249 = pneg %p182
        %p250 = pneg %p179
        %p251 = scmp.lt.s32.totalorder %s25, 1
        %s252 = scalar_select %p251, %s25, 1
        %s253 = smul.addr %s252, 32
        %s254 = smul.addr %s253, 8
        %s255 = scalar_lea.vmem %s0, %s254
        %v257 = vld [vmem:[%s255] sm:$0xff]
        %v258 = vld [vmem:[%s255 + $0x8] sm:$0xff]
        %v259 = vld [vmem:[%s255 + $0x10] sm:$0xff]
        %v260 = vld [vmem:[%s255 + $0x18] sm:$0xff]
        %v261 = vld [vmem:[%s255 + $0x20] sm:$0xff]
        %v262 = vld [vmem:[%s255 + $0x28] sm:$0xff]
        %v263 = vld [vmem:[%s255 + $0x30] sm:$0xff]
        %v264 = vld [vmem:[%s255 + $0x38] sm:$0xff]
        %v265 = vld [vmem:[%s255 + $0x40] sm:$0xff]
        %v266 = vld [vmem:[%s255 + $0x48] sm:$0xff]
        %v267 = vld [vmem:[%s255 + $0x50] sm:$0xff]
        %v268 = vld [vmem:[%s255 + $0x58] sm:$0xff]
        %v269 = vld [vmem:[%s255 + $0x60] sm:$0xff]
        %v270 = vld [vmem:[%s255 + $0x68] sm:$0xff]
        %v271 = vld [vmem:[%s255 + $0x70] sm:$0xff]
        %v272 = vld [vmem:[%s255 + $0x78] sm:$0xff]
        %v273 = vld [vmem:[%s255 + $0x80] sm:$0xff]
        %v274 = vld [vmem:[%s255 + $0x88] sm:$0xff]
        %v275 = vld [vmem:[%s255 + $0x90] sm:$0xff]
        %v276 = vld [vmem:[%s255 + $0x98] sm:$0xff]
        %v277 = vld [vmem:[%s255 + $0xa0] sm:$0xff]
        %v278 = vld [vmem:[%s255 + $0xa8] sm:$0xff]
        %v279 = vld [vmem:[%s255 + $0xb0] sm:$0xff]
        %v280 = vld [vmem:[%s255 + $0xb8] sm:$0xff]
        %v281 = vld [vmem:[%s255 + $0xc0] sm:$0xff]
        %v282 = vld [vmem:[%s255 + $0xc8] sm:$0xff]
        %v283 = vld [vmem:[%s255 + $0xd0] sm:$0xff]
        %v284 = vld [vmem:[%s255 + $0xd8] sm:$0xff]
        %v285 = vld [vmem:[%s255 + $0xe0] sm:$0xff]
        %v286 = vld [vmem:[%s255 + $0xe8] sm:$0xff]
        %v287 = vld [vmem:[%s255 + $0xf0] sm:$0xff]
        %v288 = vld [vmem:[%s255 + $0xf8] sm:$0xff]
        %v289 = vpack.c.bf16 %v258, %v257
        %v290 = vpack.c.bf16 %v260, %v259
        %v291 = vpack.c.bf16 %v262, %v261
        %v292 = vpack.c.bf16 %v264, %v263
        %v293 = vpack.c.bf16 %v266, %v265
        %v294 = vpack.c.bf16 %v268, %v267
        %v295 = vpack.c.bf16 %v270, %v269
        %v296 = vpack.c.bf16 %v272, %v271
        %v297 = vpack.c.bf16 %v274, %v273
        %v298 = vpack.c.bf16 %v276, %v275
        %v299 = vpack.c.bf16 %v278, %v277
        %v300 = vpack.c.bf16 %v280, %v279
        %v301 = vpack.c.bf16 %v282, %v281
        %v302 = vpack.c.bf16 %v284, %v283
        %v303 = vpack.c.bf16 %v286, %v285
        %v304 = vpack.c.bf16 %v288, %v287
        %v305 = vld [vmem:[%s1] sm:$0x3f]
        %307 = vst [vmem:[#allocation1] ss:$4 sm:$0xff] %v305
        %v308 = vld.sshfl [vmem:[#allocation1] sm:$0xff pattern:$0x73625140]
        %v309 = vld.sshfl [vmem:[#allocation1 + $0x8] sm:$0xff pattern:$0x73625140]
        %v310 = vld.sshfl [vmem:[#allocation1 + $0x10] sm:$0xff pattern:$0x73625140]
        %vm311 = vcmask 31744
        %v313 = vsel %vm311, %v289, 0
        %v316 = vsel %vm311, %v290, 0
        %v319 = vsel %vm311, %v291, 0
        %v322 = vsel %vm311, %v292, 0
        %v325 = vsel %vm311, %v293, 0
        %v328 = vsel %vm311, %v294, 0
        %v331 = vsel %vm311, %v295, 0
        %v334 = vsel %vm311, %v296, 0
        %v337 = vsel %vm311, %v297, 0
        %v340 = vsel %vm311, %v298, 0
        %v343 = vsel %vm311, %v299, 0
        %v346 = vsel %vm311, %v300, 0
        %v349 = vsel %vm311, %v301, 0
        %v352 = vsel %vm311, %v302, 0
        %v355 = vsel %vm311, %v303, 0
        %v358 = vsel %vm311, %v304, 0
        %vm360 = vcmask 1041408
        %v361 = vsel %vm360, %v308, 0
        %v363 = vsel %vm360, %v309, 0
        %v365 = vsel %vm360, %v310, 0
        %367 = vmatpush.bf16.msra.mxu0 0
        %368 = vmatpush.bf16.msra.mxu0 0
        %369 = vmatpush.bf16.msra.mxu0 0
        %370 = vmatpush.bf16.msra.mxu0 0
        %371 = vmatpush.bf16.msra.mxu0 0
        %372 = vmatpush.bf16.msra.mxu0 0
        %373 = vmatpush.bf16.msra.mxu0 0
        %374 = vmatpush.bf16.msra.mxu0 %v361
        %375 = vmatmul.bf16.gmra.mxu0 %v313
        %v376 = vpop.f32.mrf.mxu0
        %v377 = vadd.f32 0.0, %v376
        %v378 = vpop.f32.mrf.mxu0
        %v379 = vadd.f32 0.0, %v378
        %380 = vmatmul.bf16.gmra.mxu0 %v316
        %v381 = vpop.f32.mrf.mxu0
        %v382 = vadd.f32 0.0, %v381
        %v383 = vpop.f32.mrf.mxu0
        %v384 = vadd.f32 0.0, %v383
        %385 = vmatmul.bf16.gmra.mxu0 %v319
        %v386 = vpop.f32.mrf.mxu0
        %v387 = vadd.f32 0.0, %v386
        %v388 = vpop.f32.mrf.mxu0
        %v389 = vadd.f32 0.0, %v388
        %390 = vmatmul.bf16.gmra.mxu0 %v322
        %v391 = vpop.f32.mrf.mxu0
        %v392 = vadd.f32 0.0, %v391
        %v393 = vpop.f32.mrf.mxu0
        %v394 = vadd.f32 0.0, %v393
        %395 = vmatmul.bf16.gmra.mxu0 %v325
        %v396 = vpop.f32.mrf.mxu0
        %v397 = vadd.f32 0.0, %v396
        %v398 = vpop.f32.mrf.mxu0
        %v399 = vadd.f32 0.0, %v398
        %400 = vmatmul.bf16.gmra.mxu0 %v328
        %v401 = vpop.f32.mrf.mxu0
        %v402 = vadd.f32 0.0, %v401
        %v403 = vpop.f32.mrf.mxu0
        %v404 = vadd.f32 0.0, %v403
        %405 = vmatmul.bf16.gmra.mxu0 %v331
        %v406 = vpop.f32.mrf.mxu0
        %v407 = vadd.f32 0.0, %v406
        %v408 = vpop.f32.mrf.mxu0
        %v409 = vadd.f32 0.0, %v408
        %410 = vmatmul.bf16.gmra.mxu0 %v334
        %v411 = vpop.f32.mrf.mxu0
        %v412 = vadd.f32 0.0, %v411
        %v413 = vpop.f32.mrf.mxu0
        %v414 = vadd.f32 0.0, %v413
        %415 = vmatmul.bf16.gmra.mxu0 %v337
        %v416 = vpop.f32.mrf.mxu0
        %v417 = vadd.f32 0.0, %v416
        %v418 = vpop.f32.mrf.mxu0
        %v419 = vadd.f32 0.0, %v418
        %420 = vmatmul.bf16.gmra.mxu0 %v340
        %v421 = vpop.f32.mrf.mxu0
        %v422 = vadd.f32 0.0, %v421
        %v423 = vpop.f32.mrf.mxu0
        %v424 = vadd.f32 0.0, %v423
        %425 = vmatmul.bf16.gmra.mxu0 %v343
        %v426 = vpop.f32.mrf.mxu0
        %v427 = vadd.f32 0.0, %v426
        %v428 = vpop.f32.mrf.mxu0
        %v429 = vadd.f32 0.0, %v428
        %430 = vmatmul.bf16.gmra.mxu0 %v346
        %v431 = vpop.f32.mrf.mxu0
        %v432 = vadd.f32 0.0, %v431
        %v433 = vpop.f32.mrf.mxu0
        %v434 = vadd.f32 0.0, %v433
        %435 = vmatmul.bf16.gmra.mxu0 %v349
        %v436 = vpop.f32.mrf.mxu0
        %v437 = vadd.f32 0.0, %v436
        %v438 = vpop.f32.mrf.mxu0
        %v439 = vadd.f32 0.0, %v438
        %440 = vmatmul.bf16.gmra.mxu0 %v352
        %v441 = vpop.f32.mrf.mxu0
        %v442 = vadd.f32 0.0, %v441
        %v443 = vpop.f32.mrf.mxu0
        %v444 = vadd.f32 0.0, %v443
        %445 = vmatmul.bf16.gmra.mxu0 %v355
        %v446 = vpop.f32.mrf.mxu0
        %v447 = vadd.f32 0.0, %v446
        %v448 = vpop.f32.mrf.mxu0
        %v449 = vadd.f32 0.0, %v448
        %450 = vmatmul.bf16.gmra.mxu0 %v358
        %v451 = vpop.f32.mrf.mxu0
        %v452 = vadd.f32 0.0, %v451
        %v453 = vpop.f32.mrf.mxu0
        %v454 = vadd.f32 0.0, %v453
        %455 = vdwg.mxu0
        %456 = vmatpush.bf16.msra.mxu0 0
        %457 = vmatpush.bf16.msra.mxu0 0
        %458 = vmatpush.bf16.msra.mxu0 0
        %459 = vmatpush.bf16.msra.mxu0 0
        %460 = vmatpush.bf16.msra.mxu0 0
        %461 = vmatpush.bf16.msra.mxu0 0
        %462 = vmatpush.bf16.msra.mxu0 0
        %463 = vmatpush.bf16.msra.mxu0 %v363
        %464 = vmatmul.bf16.gmra.mxu0 %v313
        %v465 = vpop.f32.mrf.mxu0
        %v466 = vadd.f32 0.0, %v465
        %v467 = vpop.f32.mrf.mxu0
        %v468 = vadd.f32 0.0, %v467
        %469 = vmatmul.bf16.gmra.mxu0 %v316
        %v470 = vpop.f32.mrf.mxu0
        %v471 = vadd.f32 0.0, %v470
        %v472 = vpop.f32.mrf.mxu0
        %v473 = vadd.f32 0.0, %v472
        %474 = vmatmul.bf16.gmra.mxu0 %v319
        %v475 = vpop.f32.mrf.mxu0
        %v476 = vadd.f32 0.0, %v475
        %v477 = vpop.f32.mrf.mxu0
        %v478 = vadd.f32 0.0, %v477
        %479 = vmatmul.bf16.gmra.mxu0 %v322
        %v480 = vpop.f32.mrf.mxu0
        %v481 = vadd.f32 0.0, %v480
        %v482 = vpop.f32.mrf.mxu0
        %v483 = vadd.f32 0.0, %v482
        %484 = vmatmul.bf16.gmra.mxu0 %v325
        %v485 = vpop.f32.mrf.mxu0
        %v486 = vadd.f32 0.0, %v485
        %v487 = vpop.f32.mrf.mxu0
        %v488 = vadd.f32 0.0, %v487
        %489 = vmatmul.bf16.gmra.mxu0 %v328
        %v490 = vpop.f32.mrf.mxu0
        %v491 = vadd.f32 0.0, %v490
        %v492 = vpop.f32.mrf.mxu0
        %v493 = vadd.f32 0.0, %v492
        %494 = vmatmul.bf16.gmra.mxu0 %v331
        %v495 = vpop.f32.mrf.mxu0
        %v496 = vadd.f32 0.0, %v495
        %v497 = vpop.f32.mrf.mxu0
        %v498 = vadd.f32 0.0, %v497
        %499 = vmatmul.bf16.gmra.mxu0 %v334
        %v500 = vpop.f32.mrf.mxu0
        %v501 = vadd.f32 0.0, %v500
        %v502 = vpop.f32.mrf.mxu0
        %v503 = vadd.f32 0.0, %v502
        %504 = vmatmul.bf16.gmra.mxu0 %v337
        %v505 = vpop.f32.mrf.mxu0
        %v506 = vadd.f32 0.0, %v505
        %v507 = vpop.f32.mrf.mxu0
        %v508 = vadd.f32 0.0, %v507
        %509 = vmatmul.bf16.gmra.mxu0 %v340
        %v510 = vpop.f32.mrf.mxu0
        %v511 = vadd.f32 0.0, %v510
        %v512 = vpop.f32.mrf.mxu0
        %v513 = vadd.f32 0.0, %v512
        %514 = vmatmul.bf16.gmra.mxu0 %v343
        %v515 = vpop.f32.mrf.mxu0
        %v516 = vadd.f32 0.0, %v515
        %v517 = vpop.f32.mrf.mxu0
        %v518 = vadd.f32 0.0, %v517
        %519 = vmatmul.bf16.gmra.mxu0 %v346
        %v520 = vpop.f32.mrf.mxu0
        %v521 = vadd.f32 0.0, %v520
        %v522 = vpop.f32.mrf.mxu0
        %v523 = vadd.f32 0.0, %v522
        %524 = vmatmul.bf16.gmra.mxu0 %v349
        %v525 = vpop.f32.mrf.mxu0
        %v526 = vadd.f32 0.0, %v525
        %v527 = vpop.f32.mrf.mxu0
        %v528 = vadd.f32 0.0, %v527
        %529 = vmatmul.bf16.gmra.mxu0 %v352
        %v530 = vpop.f32.mrf.mxu0
        %v531 = vadd.f32 0.0, %v530
        %v532 = vpop.f32.mrf.mxu0
        %v533 = vadd.f32 0.0, %v532
        %534 = vmatmul.bf16.gmra.mxu0 %v355
        %v535 = vpop.f32.mrf.mxu0
        %v536 = vadd.f32 0.0, %v535
        %v537 = vpop.f32.mrf.mxu0
        %v538 = vadd.f32 0.0, %v537
        %539 = vmatmul.bf16.gmra.mxu0 %v358
        %v540 = vpop.f32.mrf.mxu0
        %v541 = vadd.f32 0.0, %v540
        %v542 = vpop.f32.mrf.mxu0
        %v543 = vadd.f32 0.0, %v542
        %544 = vdwg.mxu0
        %545 = vmatpush.bf16.msra.mxu0 0
        %546 = vmatpush.bf16.msra.mxu0 0
        %547 = vmatpush.bf16.msra.mxu0 0
        %548 = vmatpush.bf16.msra.mxu0 0
        %549 = vmatpush.bf16.msra.mxu0 0
        %550 = vmatpush.bf16.msra.mxu0 0
        %551 = vmatpush.bf16.msra.mxu0 0
        %552 = vmatpush.bf16.msra.mxu0 %v365
        %553 = vmatmul.bf16.gmra.mxu0 %v313
        %v554 = vpop.f32.mrf.mxu0
        %v555 = vadd.f32 0.0, %v554
        %v556 = vpop.f32.mrf.mxu0
        %v557 = vadd.f32 0.0, %v556
        %558 = vmatmul.bf16.gmra.mxu0 %v316
        %v559 = vpop.f32.mrf.mxu0
        %v560 = vadd.f32 0.0, %v559
        %v561 = vpop.f32.mrf.mxu0
        %v562 = vadd.f32 0.0, %v561
        %563 = vmatmul.bf16.gmra.mxu0 %v319
        %v564 = vpop.f32.mrf.mxu0
        %v565 = vadd.f32 0.0, %v564
        %v566 = vpop.f32.mrf.mxu0
        %v567 = vadd.f32 0.0, %v566
        %568 = vmatmul.bf16.gmra.mxu0 %v322
        %v569 = vpop.f32.mrf.mxu0
        %v570 = vadd.f32 0.0, %v569
        %v571 = vpop.f32.mrf.mxu0
        %v572 = vadd.f32 0.0, %v571
        %573 = vmatmul.bf16.gmra.mxu0 %v325
        %v574 = vpop.f32.mrf.mxu0
        %v575 = vadd.f32 0.0, %v574
        %v576 = vpop.f32.mrf.mxu0
        %v577 = vadd.f32 0.0, %v576
        %578 = vmatmul.bf16.gmra.mxu0 %v328
        %v579 = vpop.f32.mrf.mxu0
        %v580 = vadd.f32 0.0, %v579
        %v581 = vpop.f32.mrf.mxu0
        %v582 = vadd.f32 0.0, %v581
        %583 = vmatmul.bf16.gmra.mxu0 %v331
        %v584 = vpop.f32.mrf.mxu0
        %v585 = vadd.f32 0.0, %v584
        %v586 = vpop.f32.mrf.mxu0
        %v587 = vadd.f32 0.0, %v586
        %588 = vmatmul.bf16.gmra.mxu0 %v334
        %v589 = vpop.f32.mrf.mxu0
        %v590 = vadd.f32 0.0, %v589
        %v591 = vpop.f32.mrf.mxu0
        %v592 = vadd.f32 0.0, %v591
        %593 = vmatmul.bf16.gmra.mxu0 %v337
        %v594 = vpop.f32.mrf.mxu0
        %v595 = vadd.f32 0.0, %v594
        %v596 = vpop.f32.mrf.mxu0
        %v597 = vadd.f32 0.0, %v596
        %598 = vmatmul.bf16.gmra.mxu0 %v340
        %v599 = vpop.f32.mrf.mxu0
        %v600 = vadd.f32 0.0, %v599
        %v601 = vpop.f32.mrf.mxu0
        %v602 = vadd.f32 0.0, %v601
        %603 = vmatmul.bf16.gmra.mxu0 %v343
        %v604 = vpop.f32.mrf.mxu0
        %v605 = vadd.f32 0.0, %v604
        %v606 = vpop.f32.mrf.mxu0
        %v607 = vadd.f32 0.0, %v606
        %608 = vmatmul.bf16.gmra.mxu0 %v346
        %v609 = vpop.f32.mrf.mxu0
        %v610 = vadd.f32 0.0, %v609
        %v611 = vpop.f32.mrf.mxu0
        %v612 = vadd.f32 0.0, %v611
        %613 = vmatmul.bf16.gmra.mxu0 %v349
        %v614 = vpop.f32.mrf.mxu0
        %v615 = vadd.f32 0.0, %v614
        %v616 = vpop.f32.mrf.mxu0
        %v617 = vadd.f32 0.0, %v616
        %618 = vmatmul.bf16.gmra.mxu0 %v352
        %v619 = vpop.f32.mrf.mxu0
        %v620 = vadd.f32 0.0, %v619
        %v621 = vpop.f32.mrf.mxu0
        %v622 = vadd.f32 0.0, %v621
        %623 = vmatmul.bf16.gmra.mxu0 %v355
        %v624 = vpop.f32.mrf.mxu0
        %v625 = vadd.f32 0.0, %v624
        %v626 = vpop.f32.mrf.mxu0
        %v627 = vadd.f32 0.0, %v626
        %628 = vmatmul.bf16.gmra.mxu0 %v358
        %v629 = vpop.f32.mrf.mxu0
        %v630 = vadd.f32 0.0, %v629
        %v631 = vpop.f32.mrf.mxu0
        %v632 = vadd.f32 0.0, %v631
        %633 = vdwg.mxu0
        %634 = vst [vmem:[%s239] sm:$0xff] %v377
        %635 = vst [vmem:[%s239 + $0x8] sm:$0xff] %v466
        %636 = vst [vmem:[%s239 + $0x10] sm:$0xff] %v555
        %637 = vst [vmem:[%s239 + $0x18] sm:$0xff] %v379
        %638 = vst [vmem:[%s239 + $0x20] sm:$0xff] %v468
        %639 = vst [vmem:[%s239 + $0x28] sm:$0xff] %v557
        %640 = vst [vmem:[%s239 + $0x30] sm:$0xff] %v382
        %641 = vst [vmem:[%s239 + $0x38] sm:$0xff] %v471
        %642 = vst [vmem:[%s239 + $0x40] sm:$0xff] %v560
        %643 = vst [vmem:[%s239 + $0x48] sm:$0xff] %v384
        %644 = vst [vmem:[%s239 + $0x50] sm:$0xff] %v473
        %645 = vst [vmem:[%s239 + $0x58] sm:$0xff] %v562
        %646 = vst [vmem:[%s239 + $0x60] sm:$0xff] %v387
        %647 = vst [vmem:[%s239 + $0x68] sm:$0xff] %v476
        %648 = vst [vmem:[%s239 + $0x70] sm:$0xff] %v565
        %649 = vst [vmem:[%s239 + $0x78] sm:$0xff] %v389
        %650 = vst [vmem:[%s239 + $0x80] sm:$0xff] %v478
        %651 = vst [vmem:[%s239 + $0x88] sm:$0xff] %v567
        %652 = vst [vmem:[%s239 + $0x90] sm:$0xff] %v392
        %653 = vst [vmem:[%s239 + $0x98] sm:$0xff] %v481
        %654 = vst [vmem:[%s239 + $0xa0] sm:$0xff] %v570
        %655 = vst [vmem:[%s239 + $0xa8] sm:$0xff] %v394
        %656 = vst [vmem:[%s239 + $0xb0] sm:$0xff] %v483
        %657 = vst [vmem:[%s239 + $0xb8] sm:$0xff] %v572
        %658 = vst [vmem:[%s239 + $0xc0] sm:$0xff] %v397
        %659 = vst [vmem:[%s239 + $0xc8] sm:$0xff] %v486
        %660 = vst [vmem:[%s239 + $0xd0] sm:$0xff] %v575
        %661 = vst [vmem:[%s239 + $0xd8] sm:$0xff] %v399
        %662 = vst [vmem:[%s239 + $0xe0] sm:$0xff] %v488
        %663 = vst [vmem:[%s239 + $0xe8] sm:$0xff] %v577
        %664 = vst [vmem:[%s239 + $0xf0] sm:$0xff] %v402
        %665 = vst [vmem:[%s239 + $0xf8] sm:$0xff] %v491
        %666 = vst [vmem:[%s239 + $0x100] sm:$0xff] %v580
        %667 = vst [vmem:[%s239 + $0x108] sm:$0xff] %v404
        %668 = vst [vmem:[%s239 + $0x110] sm:$0xff] %v493
        %669 = vst [vmem:[%s239 + $0x118] sm:$0xff] %v582
        %670 = vst [vmem:[%s239 + $0x120] sm:$0xff] %v407
        %671 = vst [vmem:[%s239 + $0x128] sm:$0xff] %v496
        %672 = vst [vmem:[%s239 + $0x130] sm:$0xff] %v585
        %673 = vst [vmem:[%s239 + $0x138] sm:$0xff] %v409
        %674 = vst [vmem:[%s239 + $0x140] sm:$0xff] %v498
        %675 = vst [vmem:[%s239 + $0x148] sm:$0xff] %v587
        %676 = vst [vmem:[%s239 + $0x150] sm:$0xff] %v412
        %677 = vst [vmem:[%s239 + $0x158] sm:$0xff] %v501
        %678 = vst [vmem:[%s239 + $0x160] sm:$0xff] %v590
        %679 = vst [vmem:[%s239 + $0x168] sm:$0xff] %v414
        %680 = vst [vmem:[%s239 + $0x170] sm:$0xff] %v503
        %681 = vst [vmem:[%s239 + $0x178] sm:$0xff] %v592
        %682 = vst [vmem:[%s239 + $0x180] sm:$0xff] %v417
        %683 = vst [vmem:[%s239 + $0x188] sm:$0xff] %v506
        %684 = vst [vmem:[%s239 + $0x190] sm:$0xff] %v595
        %685 = vst [vmem:[%s239 + $0x198] sm:$0xff] %v419
        %686 = vst [vmem:[%s239 + $0x1a0] sm:$0xff] %v508
        %687 = vst [vmem:[%s239 + $0x1a8] sm:$0xff] %v597
        %688 = vst [vmem:[%s239 + $0x1b0] sm:$0xff] %v422
        %689 = vst [vmem:[%s239 + $0x1b8] sm:$0xff] %v511
        %690 = vst [vmem:[%s239 + $0x1c0] sm:$0xff] %v600
        %691 = vst [vmem:[%s239 + $0x1c8] sm:$0xff] %v424
        %692 = vst [vmem:[%s239 + $0x1d0] sm:$0xff] %v513
        %693 = vst [vmem:[%s239 + $0x1d8] sm:$0xff] %v602
        %694 = vst [vmem:[%s239 + $0x1e0] sm:$0xff] %v427
        %695 = vst [vmem:[%s239 + $0x1e8] sm:$0xff] %v516
        %696 = vst [vmem:[%s239 + $0x1f0] sm:$0xff] %v605
        %697 = vst [vmem:[%s239 + $0x1f8] sm:$0xff] %v429
        %698 = vst [vmem:[%s239 + $0x200] sm:$0xff] %v518
        %699 = vst [vmem:[%s239 + $0x208] sm:$0xff] %v607
        %700 = vst [vmem:[%s239 + $0x210] sm:$0xff] %v432
        %701 = vst [vmem:[%s239 + $0x218] sm:$0xff] %v521
        %702 = vst [vmem:[%s239 + $0x220] sm:$0xff] %v610
        %703 = vst [vmem:[%s239 + $0x228] sm:$0xff] %v434
        %704 = vst [vmem:[%s239 + $0x230] sm:$0xff] %v523
        %705 = vst [vmem:[%s239 + $0x238] sm:$0xff] %v612
        %706 = vst [vmem:[%s239 + $0x240] sm:$0xff] %v437
        %707 = vst [vmem:[%s239 + $0x248] sm:$0xff] %v526
        %708 = vst [vmem:[%s239 + $0x250] sm:$0xff] %v615
        %709 = vst [vmem:[%s239 + $0x258] sm:$0xff] %v439
        %710 = vst [vmem:[%s239 + $0x260] sm:$0xff] %v528
        %711 = vst [vmem:[%s239 + $0x268] sm:$0xff] %v617
        %712 = vst [vmem:[%s239 + $0x270] sm:$0xff] %v442
        %713 = vst [vmem:[%s239 + $0x278] sm:$0xff] %v531
        %714 = vst [vmem:[%s239 + $0x280] sm:$0xff] %v620
        %715 = vst [vmem:[%s239 + $0x288] sm:$0xff] %v444
        %716 = vst [vmem:[%s239 + $0x290] sm:$0xff] %v533
        %717 = vst [vmem:[%s239 + $0x298] sm:$0xff] %v622
        %718 = vst [vmem:[%s239 + $0x2a0] sm:$0xff] %v447
        %719 = vst [vmem:[%s239 + $0x2a8] sm:$0xff] %v536
        %720 = vst [vmem:[%s239 + $0x2b0] sm:$0xff] %v625
        %721 = vst [vmem:[%s239 + $0x2b8] sm:$0xff] %v449
        %722 = vst [vmem:[%s239 + $0x2c0] sm:$0xff] %v538
        %723 = vst [vmem:[%s239 + $0x2c8] sm:$0xff] %v627
        %724 = vst [vmem:[%s239 + $0x2d0] sm:$0xff] %v452
        %725 = vst [vmem:[%s239 + $0x2d8] sm:$0xff] %v541
        %726 = vst [vmem:[%s239 + $0x2e0] sm:$0xff] %v630
        %727 = vst [vmem:[%s239 + $0x2e8] sm:$0xff] %v454
        %728 = vst [vmem:[%s239 + $0x2f0] sm:$0xff] %v543
        %729 = vst [vmem:[%s239 + $0x2f8] sm:$0xff] %v632
        %vm762 = vcmask 1040384
        %v763 = vrot.slane %v257, 7
        %v764 = vrot.slane %v258, 7
        %v765 = vsel %vm762, %v763, %v764
        %v766 = vrot.slane %v259, 7
        %v767 = vrot.slane %v260, 7
        %v768 = vsel %vm762, %v766, %v767
        %v769 = vrot.slane %v261, 7
        %v770 = vrot.slane %v262, 7
        %v771 = vsel %vm762, %v769, %v770
        %v772 = vrot.slane %v263, 7
        %v773 = vrot.slane %v264, 7
        %v774 = vsel %vm762, %v772, %v773
        %v775 = vrot.slane %v265, 7
        %v776 = vrot.slane %v266, 7
        %v777 = vsel %vm762, %v775, %v776
        %v778 = vrot.slane %v267, 7
        %v779 = vrot.slane %v268, 7
        %v780 = vsel %vm762, %v778, %v779
        %v781 = vrot.slane %v269, 7
        %v782 = vrot.slane %v270, 7
        %v783 = vsel %vm762, %v781, %v782
        %v784 = vrot.slane %v271, 7
        %v785 = vrot.slane %v272, 7
        %v786 = vsel %vm762, %v784, %v785
        %v787 = vrot.slane %v273, 7
        %v788 = vrot.slane %v274, 7
        %v789 = vsel %vm762, %v787, %v788
        %v790 = vrot.slane %v275, 7
        %v791 = vrot.slane %v276, 7
        %v792 = vsel %vm762, %v790, %v791
        %v793 = vrot.slane %v277, 7
        %v794 = vrot.slane %v278, 7
        %v795 = vsel %vm762, %v793, %v794
        %v796 = vrot.slane %v279, 7
        %v797 = vrot.slane %v280, 7
        %v798 = vsel %vm762, %v796, %v797
        %v799 = vrot.slane %v281, 7
        %v800 = vrot.slane %v282, 7
        %v801 = vsel %vm762, %v799, %v800
        %v802 = vrot.slane %v283, 7
        %v803 = vrot.slane %v284, 7
        %v804 = vsel %vm762, %v802, %v803
        %v805 = vrot.slane %v285, 7
        %v806 = vrot.slane %v286, 7
        %v807 = vsel %vm762, %v805, %v806
        %v808 = vrot.slane %v287, 7
        %v809 = vrot.slane %v288, 7
        %v810 = vsel %vm762, %v808, %v809
        %v859 = vsel %vm762, -inf, %v763
        %v860 = vsel %vm762, -inf, %v766
        %v861 = vsel %vm762, -inf, %v769
        %v862 = vsel %vm762, -inf, %v772
        %v863 = vsel %vm762, -inf, %v775
        %v864 = vsel %vm762, -inf, %v778
        %v865 = vsel %vm762, -inf, %v781
        %v866 = vsel %vm762, -inf, %v784
        %v867 = vsel %vm762, -inf, %v787
        %v868 = vsel %vm762, -inf, %v790
        %v869 = vsel %vm762, -inf, %v793
        %v870 = vsel %vm762, -inf, %v796
        %v871 = vsel %vm762, -inf, %v799
        %v872 = vsel %vm762, -inf, %v802
        %v873 = vsel %vm762, -inf, %v805
        %v874 = vsel %vm762, -inf, %v808
        %v875 = vsel %vm762, %v764, -inf
        %v876 = vsel %vm762, %v767, -inf
        %v877 = vsel %vm762, %v770, -inf
        %v878 = vsel %vm762, %v773, -inf
        %v879 = vsel %vm762, %v776, -inf
        %v880 = vsel %vm762, %v779, -inf
        %v881 = vsel %vm762, %v782, -inf
        %v882 = vsel %vm762, %v785, -inf
        %v883 = vsel %vm762, %v788, -inf
        %v884 = vsel %vm762, %v791, -inf
        %v885 = vsel %vm762, %v794, -inf
        %v886 = vsel %vm762, %v797, -inf
        %v887 = vsel %vm762, %v800, -inf
        %v888 = vsel %vm762, %v803, -inf
        %v889 = vsel %vm762, %v806, -inf
        %v890 = vsel %vm762, %v809, -inf
        %v891 = vmax.f32 %v257, %v859
        %v892 = vmax.f32 %v258, %v765
        %v893 = vmax.f32 %v259, %v860
        %v894 = vmax.f32 %v260, %v768
        %v895 = vmax.f32 %v261, %v861
        %v896 = vmax.f32 %v262, %v771
        %v897 = vmax.f32 %v263, %v862
        %v898 = vmax.f32 %v264, %v774
        %v899 = vmax.f32 %v265, %v863
        %v900 = vmax.f32 %v266, %v777
        %v901 = vmax.f32 %v267, %v864
        %v902 = vmax.f32 %v268, %v780
        %v903 = vmax.f32 %v269, %v865
        %v904 = vmax.f32 %v270, %v783
        %v905 = vmax.f32 %v271, %v866
        %v906 = vmax.f32 %v272, %v786
        %v907 = vmax.f32 %v273, %v867
        %v908 = vmax.f32 %v274, %v789
        %v909 = vmax.f32 %v275, %v868
        %v910 = vmax.f32 %v276, %v792
        %v911 = vmax.f32 %v277, %v869
        %v912 = vmax.f32 %v278, %v795
        %v913 = vmax.f32 %v279, %v870
        %v914 = vmax.f32 %v280, %v798
        %v915 = vmax.f32 %v281, %v871
        %v916 = vmax.f32 %v282, %v801
        %v917 = vmax.f32 %v283, %v872
        %v918 = vmax.f32 %v284, %v804
        %v919 = vmax.f32 %v285, %v873
        %v920 = vmax.f32 %v286, %v807
        %v921 = vmax.f32 %v287, %v874
        %v922 = vmax.f32 %v288, %v810
        %vm955 = vcmask 1045504
        %v956 = vrot.slane %v859, 2
        %v957 = vrot.slane %v765, 2
        %v958 = vsel %vm955, %v956, %v957
        %v959 = vrot.slane %v875, 2
        %v960 = vsel %vm955, %v957, %v959
        %v961 = vrot.slane %v860, 2
        %v962 = vrot.slane %v768, 2
        %v963 = vsel %vm955, %v961, %v962
        %v964 = vrot.slane %v876, 2
        %v965 = vsel %vm955, %v962, %v964
        %v966 = vrot.slane %v861, 2
        %v967 = vrot.slane %v771, 2
        %v968 = vsel %vm955, %v966, %v967
        %v969 = vrot.slane %v877, 2
        %v970 = vsel %vm955, %v967, %v969
        %v971 = vrot.slane %v862, 2
        %v972 = vrot.slane %v774, 2
        %v973 = vsel %vm955, %v971, %v972
        %v974 = vrot.slane %v878, 2
        %v975 = vsel %vm955, %v972, %v974
        %v976 = vrot.slane %v863, 2
        %v977 = vrot.slane %v777, 2
        %v978 = vsel %vm955, %v976, %v977
        %v979 = vrot.slane %v879, 2
        %v980 = vsel %vm955, %v977, %v979
        %v981 = vrot.slane %v864, 2
        %v982 = vrot.slane %v780, 2
        %v983 = vsel %vm955, %v981, %v982
        %v984 = vrot.slane %v880, 2
        %v985 = vsel %vm955, %v982, %v984
        %v986 = vrot.slane %v865, 2
        %v987 = vrot.slane %v783, 2
        %v988 = vsel %vm955, %v986, %v987
        %v989 = vrot.slane %v881, 2
        %v990 = vsel %vm955, %v987, %v989
        %v991 = vrot.slane %v866, 2
        %v992 = vrot.slane %v786, 2
        %v993 = vsel %vm955, %v991, %v992
        %v994 = vrot.slane %v882, 2
        %v995 = vsel %vm955, %v992, %v994
        %v996 = vrot.slane %v867, 2
        %v997 = vrot.slane %v789, 2
        %v998 = vsel %vm955, %v996, %v997
        %v999 = vrot.slane %v883, 2
        %v1000 = vsel %vm955, %v997, %v999
        %v1001 = vrot.slane %v868, 2
        %v1002 = vrot.slane %v792, 2
        %v1003 = vsel %vm955, %v1001, %v1002
        %v1004 = vrot.slane %v884, 2
        %v1005 = vsel %vm955, %v1002, %v1004
        %v1006 = vrot.slane %v869, 2
        %v1007 = vrot.slane %v795, 2
        %v1008 = vsel %vm955, %v1006, %v1007
        %v1009 = vrot.slane %v885, 2
        %v1010 = vsel %vm955, %v1007, %v1009
        %v1011 = vrot.slane %v870, 2
        %v1012 = vrot.slane %v798, 2
        %v1013 = vsel %vm955, %v1011, %v1012
        %v1014 = vrot.slane %v886, 2
        %v1015 = vsel %vm955, %v1012, %v1014
        %v1016 = vrot.slane %v871, 2
        %v1017 = vrot.slane %v801, 2
        %v1018 = vsel %vm955, %v1016, %v1017
        %v1019 = vrot.slane %v887, 2
        %v1020 = vsel %vm955, %v1017, %v1019
        %v1021 = vrot.slane %v872, 2
        %v1022 = vrot.slane %v804, 2
        %v1023 = vsel %vm955, %v1021, %v1022
        %v1024 = vrot.slane %v888, 2
        %v1025 = vsel %vm955, %v1022, %v1024
        %v1026 = vrot.slane %v873, 2
        %v1027 = vrot.slane %v807, 2
        %v1028 = vsel %vm955, %v1026, %v1027
        %v1029 = vrot.slane %v889, 2
        %v1030 = vsel %vm955, %v1027, %v1029
        %v1031 = vrot.slane %v874, 2
        %v1032 = vrot.slane %v810, 2
        %v1033 = vsel %vm955, %v1031, %v1032
        %v1034 = vrot.slane %v890, 2
        %v1035 = vsel %vm955, %v1032, %v1034
        %v1068 = vmax.f32 %v891, %v958
        %v1069 = vmax.f32 %v892, %v960
        %v1070 = vmax.f32 %v893, %v963
        %v1071 = vmax.f32 %v894, %v965
        %v1072 = vmax.f32 %v895, %v968
        %v1073 = vmax.f32 %v896, %v970
        %v1074 = vmax.f32 %v897, %v973
        %v1075 = vmax.f32 %v898, %v975
        %v1076 = vmax.f32 %v899, %v978
        %v1077 = vmax.f32 %v900, %v980
        %v1078 = vmax.f32 %v901, %v983
        %v1079 = vmax.f32 %v902, %v985
        %v1080 = vmax.f32 %v903, %v988
        %v1081 = vmax.f32 %v904, %v990
        %v1082 = vmax.f32 %v905, %v993
        %v1083 = vmax.f32 %v906, %v995
        %v1084 = vmax.f32 %v907, %v998
        %v1085 = vmax.f32 %v908, %v1000
        %v1086 = vmax.f32 %v909, %v1003
        %v1087 = vmax.f32 %v910, %v1005
        %v1088 = vmax.f32 %v911, %v1008
        %v1089 = vmax.f32 %v912, %v1010
        %v1090 = vmax.f32 %v913, %v1013
        %v1091 = vmax.f32 %v914, %v1015
        %v1092 = vmax.f32 %v915, %v1018
        %v1093 = vmax.f32 %v916, %v1020
        %v1094 = vmax.f32 %v917, %v1023
        %v1095 = vmax.f32 %v918, %v1025
        %v1096 = vmax.f32 %v919, %v1028
        %v1097 = vmax.f32 %v920, %v1030
        %v1098 = vmax.f32 %v921, %v1033
        %v1099 = vmax.f32 %v922, %v1035
        %v1100 = vmax.f32 %v1070, %v1068
        %v1101 = vmax.f32 %v1071, %v1069
        %v1102 = vmax.f32 %v1072, %v1070
        %v1103 = vmax.f32 %v1073, %v1071
        %v1104 = vmax.f32 %v1074, %v1072
        %v1105 = vmax.f32 %v1075, %v1073
        %v1106 = vmax.f32 %v1076, %v1074
        %v1107 = vmax.f32 %v1077, %v1075
        %v1108 = vmax.f32 %v1078, %v1076
        %v1109 = vmax.f32 %v1079, %v1077
        %v1110 = vmax.f32 %v1080, %v1078
        %v1111 = vmax.f32 %v1081, %v1079
        %v1112 = vmax.f32 %v1082, %v1080
        %v1113 = vmax.f32 %v1083, %v1081
        %v1114 = vmax.f32 %v1084, %v1082
        %v1115 = vmax.f32 %v1085, %v1083
        %v1116 = vmax.f32 %v1086, %v1084
        %v1117 = vmax.f32 %v1087, %v1085
        %v1118 = vmax.f32 %v1088, %v1086
        %v1119 = vmax.f32 %v1089, %v1087
        %v1120 = vmax.f32 %v1090, %v1088
        %v1121 = vmax.f32 %v1091, %v1089
        %v1122 = vmax.f32 %v1092, %v1090
        %v1123 = vmax.f32 %v1093, %v1091
        %v1124 = vmax.f32 %v1094, %v1092
        %v1125 = vmax.f32 %v1095, %v1093
        %v1126 = vmax.f32 %v1096, %v1094
        %v1127 = vmax.f32 %v1097, %v1095
        %v1128 = vmax.f32 %v1098, %v1096
        %v1129 = vmax.f32 %v1099, %v1097
        %v1130 = vmax.f32 %v1100, %v1072
        %v1131 = vmax.f32 %v1101, %v1073
        %v1132 = vmax.f32 %v1102, %v1074
        %v1133 = vmax.f32 %v1103, %v1075
        %v1134 = vmax.f32 %v1104, %v1076
        %v1135 = vmax.f32 %v1105, %v1077
        %v1136 = vmax.f32 %v1106, %v1078
        %v1137 = vmax.f32 %v1107, %v1079
        %v1138 = vmax.f32 %v1108, %v1080
        %v1139 = vmax.f32 %v1109, %v1081
        %v1140 = vmax.f32 %v1110, %v1082
        %v1141 = vmax.f32 %v1111, %v1083
        %v1142 = vmax.f32 %v1112, %v1084
        %v1143 = vmax.f32 %v1113, %v1085
        %v1144 = vmax.f32 %v1114, %v1086
        %v1145 = vmax.f32 %v1115, %v1087
        %v1146 = vmax.f32 %v1116, %v1088
        %v1147 = vmax.f32 %v1117, %v1089
        %v1148 = vmax.f32 %v1118, %v1090
        %v1149 = vmax.f32 %v1119, %v1091
        %v1150 = vmax.f32 %v1120, %v1092
        %v1151 = vmax.f32 %v1121, %v1093
        %v1152 = vmax.f32 %v1122, %v1094
        %v1153 = vmax.f32 %v1123, %v1095
        %v1154 = vmax.f32 %v1124, %v1096
        %v1155 = vmax.f32 %v1125, %v1097
        %v1156 = vmax.f32 %v1126, %v1098
        %v1157 = vmax.f32 %v1127, %v1099
        %v1158 = vpack.c.bf16 %v1101, %v1100
        %v1159 = vpack.c.bf16 %v1131, %v1130
        %v1160 = vpack.c.bf16 %v1133, %v1132
        %v1161 = vpack.c.bf16 %v1135, %v1134
        %v1162 = vpack.c.bf16 %v1137, %v1136
        %v1163 = vpack.c.bf16 %v1139, %v1138
        %v1164 = vpack.c.bf16 %v1141, %v1140
        %v1165 = vpack.c.bf16 %v1143, %v1142
        %v1166 = vpack.c.bf16 %v1145, %v1144
        %v1167 = vpack.c.bf16 %v1147, %v1146
        %v1168 = vpack.c.bf16 %v1149, %v1148
        %v1169 = vpack.c.bf16 %v1151, %v1150
        %v1170 = vpack.c.bf16 %v1153, %v1152
        %v1171 = vpack.c.bf16 %v1155, %v1154
        %v1172 = vpack.c.bf16 %v1157, %v1156
        %v1173 = vpack.c.bf16 %v1129, %v1128
        %v1174 = vld [vmem:[%s2] sm:$0x3]
        %v1176 = vsel %vm311, %v1158, 0
        %v1179 = vsel %vm311, %v1159, 0
        %v1182 = vsel %vm311, %v1160, 0
        %v1185 = vsel %vm311, %v1161, 0
        %v1188 = vsel %vm311, %v1162, 0
        %v1191 = vsel %vm311, %v1163, 0
        %v1194 = vsel %vm311, %v1164, 0
        %v1197 = vsel %vm311, %v1165, 0
        %v1200 = vsel %vm311, %v1166, 0
        %v1203 = vsel %vm311, %v1167, 0
        %v1206 = vsel %vm311, %v1168, 0
        %v1209 = vsel %vm311, %v1169, 0
        %v1212 = vsel %vm311, %v1170, 0
        %v1215 = vsel %vm311, %v1171, 0
        %v1218 = vsel %vm311, %v1172, 0
        %v1221 = vsel %vm311, %v1173, 0
        %v1224 = vsel %vm360, %v1174, 0
        %1226 = vmatpush.bf16.msra.mxu0 0
        %1227 = vmatpush.bf16.msra.mxu0 0
        %1228 = vmatpush.bf16.msra.mxu0 0
        %1229 = vmatpush.bf16.msra.mxu0 0
        %1230 = vmatpush.bf16.msra.mxu0 0
        %1231 = vmatpush.bf16.msra.mxu0 0
        %1232 = vmatpush.bf16.msra.mxu0 0
        %1233 = vmatpush.bf16.msra.mxu0 %v1224
        %1234 = vmatmul.bf16.gmra.mxu0 %v1176
        %v1235 = vpop.f32.mrf.mxu0
        %v1236 = vadd.f32 0.0, %v1235
        %v1237 = vpop.f32.mrf.mxu0
        %v1238 = vadd.f32 0.0, %v1237
        %1239 = vmatmul.bf16.gmra.mxu0 %v1179
        %v1240 = vpop.f32.mrf.mxu0
        %v1241 = vadd.f32 0.0, %v1240
        %v1242 = vpop.f32.mrf.mxu0
        %v1243 = vadd.f32 0.0, %v1242
        %1244 = vmatmul.bf16.gmra.mxu0 %v1182
        %v1245 = vpop.f32.mrf.mxu0
        %v1246 = vadd.f32 0.0, %v1245
        %v1247 = vpop.f32.mrf.mxu0
        %v1248 = vadd.f32 0.0, %v1247
        %1249 = vmatmul.bf16.gmra.mxu0 %v1185
        %v1250 = vpop.f32.mrf.mxu0
        %v1251 = vadd.f32 0.0, %v1250
        %v1252 = vpop.f32.mrf.mxu0
        %v1253 = vadd.f32 0.0, %v1252
        %1254 = vmatmul.bf16.gmra.mxu0 %v1188
        %v1255 = vpop.f32.mrf.mxu0
        %v1256 = vadd.f32 0.0, %v1255
        %v1257 = vpop.f32.mrf.mxu0
        %v1258 = vadd.f32 0.0, %v1257
        %1259 = vmatmul.bf16.gmra.mxu0 %v1191
        %v1260 = vpop.f32.mrf.mxu0
        %v1261 = vadd.f32 0.0, %v1260
        %v1262 = vpop.f32.mrf.mxu0
        %v1263 = vadd.f32 0.0, %v1262
        %1264 = vmatmul.bf16.gmra.mxu0 %v1194
        %v1265 = vpop.f32.mrf.mxu0
        %v1266 = vadd.f32 0.0, %v1265
        %v1267 = vpop.f32.mrf.mxu0
        %v1268 = vadd.f32 0.0, %v1267
        %1269 = vmatmul.bf16.gmra.mxu0 %v1197
        %v1270 = vpop.f32.mrf.mxu0
        %v1271 = vadd.f32 0.0, %v1270
        %v1272 = vpop.f32.mrf.mxu0
        %v1273 = vadd.f32 0.0, %v1272
        %1274 = vmatmul.bf16.gmra.mxu0 %v1200
        %v1275 = vpop.f32.mrf.mxu0
        %v1276 = vadd.f32 0.0, %v1275
        %v1277 = vpop.f32.mrf.mxu0
        %v1278 = vadd.f32 0.0, %v1277
        %1279 = vmatmul.bf16.gmra.mxu0 %v1203
        %v1280 = vpop.f32.mrf.mxu0
        %v1281 = vadd.f32 0.0, %v1280
        %v1282 = vpop.f32.mrf.mxu0
        %v1283 = vadd.f32 0.0, %v1282
        %1284 = vmatmul.bf16.gmra.mxu0 %v1206
        %v1285 = vpop.f32.mrf.mxu0
        %v1286 = vadd.f32 0.0, %v1285
        %v1287 = vpop.f32.mrf.mxu0
        %v1288 = vadd.f32 0.0, %v1287
        %1289 = vmatmul.bf16.gmra.mxu0 %v1209
        %v1290 = vpop.f32.mrf.mxu0
        %v1291 = vadd.f32 0.0, %v1290
        %v1292 = vpop.f32.mrf.mxu0
        %v1293 = vadd.f32 0.0, %v1292
        %1294 = vmatmul.bf16.gmra.mxu0 %v1212
        %v1295 = vpop.f32.mrf.mxu0
        %v1296 = vadd.f32 0.0, %v1295
        %v1297 = vpop.f32.mrf.mxu0
        %v1298 = vadd.f32 0.0, %v1297
        %1299 = vmatmul.bf16.gmra.mxu0 %v1215
        %v1300 = vpop.f32.mrf.mxu0
        %v1301 = vadd.f32 0.0, %v1300
        %v1302 = vpop.f32.mrf.mxu0
        %v1303 = vadd.f32 0.0, %v1302
        %1304 = vmatmul.bf16.gmra.mxu0 %v1218
        %v1305 = vpop.f32.mrf.mxu0
        %v1306 = vadd.f32 0.0, %v1305
        %v1307 = vpop.f32.mrf.mxu0
        %v1308 = vadd.f32 0.0, %v1307
        %1309 = vmatmul.bf16.gmra.mxu0 %v1221
        %v1310 = vpop.f32.mrf.mxu0
        %v1311 = vadd.f32 0.0, %v1310
        %v1312 = vpop.f32.mrf.mxu0
        %v1313 = vadd.f32 0.0, %v1312
        %1314 = vdwg.mxu0
        %1315 = vst [vmem:[%s246] sm:$0xff] %v1236
        %1316 = vst [vmem:[%s246 + $0x8] sm:$0xff] %v1238
        %1317 = vst [vmem:[%s246 + $0x10] sm:$0xff] %v1241
        %1318 = vst [vmem:[%s246 + $0x18] sm:$0xff] %v1243
        %1319 = vst [vmem:[%s246 + $0x20] sm:$0xff] %v1246
        %1320 = vst [vmem:[%s246 + $0x28] sm:$0xff] %v1248
        %1321 = vst [vmem:[%s246 + $0x30] sm:$0xff] %v1251
        %1322 = vst [vmem:[%s246 + $0x38] sm:$0xff] %v1253
        %1323 = vst [vmem:[%s246 + $0x40] sm:$0xff] %v1256
        %1324 = vst [vmem:[%s246 + $0x48] sm:$0xff] %v1258
        %1325 = vst [vmem:[%s246 + $0x50] sm:$0xff] %v1261
        %1326 = vst [vmem:[%s246 + $0x58] sm:$0xff] %v1263
        %1327 = vst [vmem:[%s246 + $0x60] sm:$0xff] %v1266
        %1328 = vst [vmem:[%s246 + $0x68] sm:$0xff] %v1268
        %1329 = vst [vmem:[%s246 + $0x70] sm:$0xff] %v1271
        %1330 = vst [vmem:[%s246 + $0x78] sm:$0xff] %v1273
        %1331 = vst [vmem:[%s246 + $0x80] sm:$0xff] %v1276
        %1332 = vst [vmem:[%s246 + $0x88] sm:$0xff] %v1278
        %1333 = vst [vmem:[%s246 + $0x90] sm:$0xff] %v1281
        %1334 = vst [vmem:[%s246 + $0x98] sm:$0xff] %v1283
        %1335 = vst [vmem:[%s246 + $0xa0] sm:$0xff] %v1286
        %1336 = vst [vmem:[%s246 + $0xa8] sm:$0xff] %v1288
        %1337 = vst [vmem:[%s246 + $0xb0] sm:$0xff] %v1291
        %1338 = vst [vmem:[%s246 + $0xb8] sm:$0xff] %v1293
        %1339 = vst [vmem:[%s246 + $0xc0] sm:$0xff] %v1296
        %1340 = vst [vmem:[%s246 + $0xc8] sm:$0xff] %v1298
        %1341 = vst [vmem:[%s246 + $0xd0] sm:$0xff] %v1301
        %1342 = vst [vmem:[%s246 + $0xd8] sm:$0xff] %v1303
        %1343 = vst [vmem:[%s246 + $0xe0] sm:$0xff] %v1306
        %1344 = vst [vmem:[%s246 + $0xe8] sm:$0xff] %v1308
        %1345 = vst [vmem:[%s246 + $0xf0] sm:$0xff] %v1311
        %1346 = vst [vmem:[%s246 + $0xf8] sm:$0xff] %v1313
        %p1347 = scmp.eq.s32.totalorder %s25, 0
        // Predicated region
        $region33: #{tpu_custom_call.1} parent=31 // pred_check
          %p1348 = pneg %p1347
        $region34: #{tpu_custom_call.1} parent=31 // pred_check_branch
          %1350 = sbr.rel (%p1348) target = $region36
        $region35: #{tpu_custom_call.1} parent=31 // pred_region
          %1351 = vst [vmem:[#allocation6] sm:$0x3f] 0.0
          %1352 = vst [vmem:[#allocation7] sm:$0x3] 0.0
        $region36: #{tpu_custom_call.1} parent=31 // pred_fallthru
          _
        %v1353 = vld [vmem:[#allocation6] sm:$0x3f]
        %v1354 = vadd.f32 %v377, %v379
        %v1355 = vadd.f32 %v1354, %v382
        %v1356 = vadd.f32 %v1355, %v384
        %v1357 = vadd.f32 %v1356, %v387
        %v1358 = vadd.f32 %v1357, %v389
        %v1359 = vadd.f32 %v1358, %v392
        %v1360 = vadd.f32 %v1359, %v394
        %v1361 = vadd.f32 %v1360, %v397
        %v1362 = vadd.f32 %v1361, %v399
        %v1363 = vadd.f32 %v1362, %v402
        %v1364 = vadd.f32 %v1363, %v404
        %v1365 = vadd.f32 %v1364, %v407
        %v1366 = vadd.f32 %v1365, %v409
        %v1367 = vadd.f32 %v1366, %v412
        %v1368 = vadd.f32 %v1367, %v414
        %v1369 = vadd.f32 %v1368, %v417
        %v1370 = vadd.f32 %v1369, %v419
        %v1371 = vadd.f32 %v1370, %v422
        %v1372 = vadd.f32 %v1371, %v424
        %v1373 = vadd.f32 %v1372, %v427
        %v1374 = vadd.f32 %v1373, %v429
        %v1375 = vadd.f32 %v1374, %v432
        %v1376 = vadd.f32 %v1375, %v434
        %v1377 = vadd.f32 %v1376, %v437
        %v1378 = vadd.f32 %v1377, %v439
        %v1379 = vadd.f32 %v1378, %v442
        %v1380 = vadd.f32 %v1379, %v444
        %v1381 = vadd.f32 %v1380, %v447
        %v1382 = vadd.f32 %v1381, %v449
        %v1383 = vadd.f32 %v1382, %v452
        %v1384 = vadd.f32 %v1383, %v454
        %v1385 = vrot.slane %v1384, 4
        %v1386 = vadd.f32 %v1384, %v1385
        %v1387 = vrot.slane %v1386, 2
        %v1388 = vadd.f32 %v1386, %v1387
        %v1389 = vrot.slane %v1388, 1
        %v1390 = vadd.f32 %v1388, %v1389
        %v1391 = vadd.f32 %v466, %v468
        %v1392 = vadd.f32 %v1391, %v471
        %v1393 = vadd.f32 %v1392, %v473
        %v1394 = vadd.f32 %v1393, %v476
        %v1395 = vadd.f32 %v1394, %v478
        %v1396 = vadd.f32 %v1395, %v481
        %v1397 = vadd.f32 %v1396, %v483
        %v1398 = vadd.f32 %v1397, %v486
        %v1399 = vadd.f32 %v1398, %v488
        %v1400 = vadd.f32 %v1399, %v491
        %v1401 = vadd.f32 %v1400, %v493
        %v1402 = vadd.f32 %v1401, %v496
        %v1403 = vadd.f32 %v1402, %v498
        %v1404 = vadd.f32 %v1403, %v501
        %v1405 = vadd.f32 %v1404, %v503
        %v1406 = vadd.f32 %v1405, %v506
        %v1407 = vadd.f32 %v1406, %v508
        %v1408 = vadd.f32 %v1407, %v511
        %v1409 = vadd.f32 %v1408, %v513
        %v1410 = vadd.f32 %v1409, %v516
        %v1411 = vadd.f32 %v1410, %v518
        %v1412 = vadd.f32 %v1411, %v521
        %v1413 = vadd.f32 %v1412, %v523
        %v1414 = vadd.f32 %v1413, %v526
        %v1415 = vadd.f32 %v1414, %v528
        %v1416 = vadd.f32 %v1415, %v531
        %v1417 = vadd.f32 %v1416, %v533
        %v1418 = vadd.f32 %v1417, %v536
        %v1419 = vadd.f32 %v1418, %v538
        %v1420 = vadd.f32 %v1419, %v541
        %v1421 = vadd.f32 %v1420, %v543
        %v1422 = vrot.slane %v1421, 4
        %v1423 = vadd.f32 %v1421, %v1422
        %v1424 = vrot.slane %v1423, 2
        %v1425 = vadd.f32 %v1423, %v1424
        %v1426 = vrot.slane %v1425, 1
        %v1427 = vadd.f32 %v1425, %v1426
        %v1428 = vadd.f32 %v555, %v557
        %v1429 = vadd.f32 %v1428, %v560
        %v1430 = vadd.f32 %v1429, %v562
        %v1431 = vadd.f32 %v1430, %v565
        %v1432 = vadd.f32 %v1431, %v567
        %v1433 = vadd.f32 %v1432, %v570
        %v1434 = vadd.f32 %v1433, %v572
        %v1435 = vadd.f32 %v1434, %v575
        %v1436 = vadd.f32 %v1435, %v577
        %v1437 = vadd.f32 %v1436, %v580
        %v1438 = vadd.f32 %v1437, %v582
        %v1439 = vadd.f32 %v1438, %v585
        %v1440 = vadd.f32 %v1439, %v587
        %v1441 = vadd.f32 %v1440, %v590
        %v1442 = vadd.f32 %v1441, %v592
        %v1443 = vadd.f32 %v1442, %v595
        %v1444 = vadd.f32 %v1443, %v597
        %v1445 = vadd.f32 %v1444, %v600
        %v1446 = vadd.f32 %v1445, %v602
        %v1447 = vadd.f32 %v1446, %v605
        %v1448 = vadd.f32 %v1447, %v607
        %v1449 = vadd.f32 %v1448, %v610
        %v1450 = vadd.f32 %v1449, %v612
        %v1451 = vadd.f32 %v1450, %v615
        %v1452 = vadd.f32 %v1451, %v617
        %v1453 = vadd.f32 %v1452, %v620
        %v1454 = vadd.f32 %v1453, %v622
        %v1455 = vadd.f32 %v1454, %v625
        %v1456 = vadd.f32 %v1455, %v627
        %v1457 = vadd.f32 %v1456, %v630
        %v1458 = vadd.f32 %v1457, %v632
        %v1459 = vrot.slane %v1458, 4
        %v1460 = vadd.f32 %v1458, %v1459
        %v1461 = vrot.slane %v1460, 2
        %v1462 = vadd.f32 %v1460, %v1461
        %v1463 = vrot.slane %v1462, 1
        %v1464 = vadd.f32 %v1462, %v1463
        %v1465 = vmul.f32 %v377, %v377
        %v1466 = vmul.f32 %v466, %v466
        %v1467 = vmul.f32 %v555, %v555
        %v1468 = vmul.f32 %v379, %v379
        %v1469 = vmul.f32 %v468, %v468
        %v1470 = vmul.f32 %v557, %v557
        %v1471 = vmul.f32 %v382, %v382
        %v1472 = vmul.f32 %v471, %v471
        %v1473 = vmul.f32 %v560, %v560
        %v1474 = vmul.f32 %v384, %v384
        %v1475 = vmul.f32 %v473, %v473
        %v1476 = vmul.f32 %v562, %v562
        %v1477 = vmul.f32 %v387, %v387
        %v1478 = vmul.f32 %v476, %v476
        %v1479 = vmul.f32 %v565, %v565
        %v1480 = vmul.f32 %v389, %v389
        %v1481 = vmul.f32 %v478, %v478
        %v1482 = vmul.f32 %v567, %v567
        %v1483 = vmul.f32 %v392, %v392
        %v1484 = vmul.f32 %v481, %v481
        %v1485 = vmul.f32 %v570, %v570
        %v1486 = vmul.f32 %v394, %v394
        %v1487 = vmul.f32 %v483, %v483
        %v1488 = vmul.f32 %v572, %v572
        %v1489 = vmul.f32 %v397, %v397
        %v1490 = vmul.f32 %v486, %v486
        %v1491 = vmul.f32 %v575, %v575
        %v1492 = vmul.f32 %v399, %v399
        %v1493 = vmul.f32 %v488, %v488
        %v1494 = vmul.f32 %v577, %v577
        %v1495 = vmul.f32 %v402, %v402
        %v1496 = vmul.f32 %v491, %v491
        %v1497 = vmul.f32 %v580, %v580
        %v1498 = vmul.f32 %v404, %v404
        %v1499 = vmul.f32 %v493, %v493
        %v1500 = vmul.f32 %v582, %v582
        %v1501 = vmul.f32 %v407, %v407
        %v1502 = vmul.f32 %v496, %v496
        %v1503 = vmul.f32 %v585, %v585
        %v1504 = vmul.f32 %v409, %v409
        %v1505 = vmul.f32 %v498, %v498
        %v1506 = vmul.f32 %v587, %v587
        %v1507 = vmul.f32 %v412, %v412
        %v1508 = vmul.f32 %v501, %v501
        %v1509 = vmul.f32 %v590, %v590
        %v1510 = vmul.f32 %v414, %v414
        %v1511 = vmul.f32 %v503, %v503
        %v1512 = vmul.f32 %v592, %v592
        %v1513 = vmul.f32 %v417, %v417
        %v1514 = vmul.f32 %v506, %v506
        %v1515 = vmul.f32 %v595, %v595
        %v1516 = vmul.f32 %v419, %v419
        %v1517 = vmul.f32 %v508, %v508
        %v1518 = vmul.f32 %v597, %v597
        %v1519 = vmul.f32 %v422, %v422
        %v1520 = vmul.f32 %v511, %v511
        %v1521 = vmul.f32 %v600, %v600
        %v1522 = vmul.f32 %v424, %v424
        %v1523 = vmul.f32 %v513, %v513
        %v1524 = vmul.f32 %v602, %v602
        %v1525 = vmul.f32 %v427, %v427
        %v1526 = vmul.f32 %v516, %v516
        %v1527 = vmul.f32 %v605, %v605
        %v1528 = vmul.f32 %v429, %v429
        %v1529 = vmul.f32 %v518, %v518
        %v1530 = vmul.f32 %v607, %v607
        %v1531 = vmul.f32 %v432, %v432
        %v1532 = vmul.f32 %v521, %v521
        %v1533 = vmul.f32 %v610, %v610
        %v1534 = vmul.f32 %v434, %v434
        %v1535 = vmul.f32 %v523, %v523
        %v1536 = vmul.f32 %v612, %v612
        %v1537 = vmul.f32 %v437, %v437
        %v1538 = vmul.f32 %v526, %v526
        %v1539 = vmul.f32 %v615, %v615
        %v1540 = vmul.f32 %v439, %v439
        %v1541 = vmul.f32 %v528, %v528
        %v1542 = vmul.f32 %v617, %v617
        %v1543 = vmul.f32 %v442, %v442
        %v1544 = vmul.f32 %v531, %v531
        %v1545 = vmul.f32 %v620, %v620
        %v1546 = vmul.f32 %v444, %v444
        %v1547 = vmul.f32 %v533, %v533
        %v1548 = vmul.f32 %v622, %v622
        %v1549 = vmul.f32 %v447, %v447
        %v1550 = vmul.f32 %v536, %v536
        %v1551 = vmul.f32 %v625, %v625
        %v1552 = vmul.f32 %v449, %v449
        %v1553 = vmul.f32 %v538, %v538
        %v1554 = vmul.f32 %v627, %v627
        %v1555 = vmul.f32 %v452, %v452
        %v1556 = vmul.f32 %v541, %v541
        %v1557 = vmul.f32 %v630, %v630
        %v1558 = vmul.f32 %v454, %v454
        %v1559 = vmul.f32 %v543, %v543
        %v1560 = vmul.f32 %v632, %v632
        %v1561 = vadd.f32 %v1465, %v1468
        %v1562 = vadd.f32 %v1561, %v1471
        %v1563 = vadd.f32 %v1562, %v1474
        %v1564 = vadd.f32 %v1563, %v1477
        %v1565 = vadd.f32 %v1564, %v1480
        %v1566 = vadd.f32 %v1565, %v1483
        %v1567 = vadd.f32 %v1566, %v1486
        %v1568 = vadd.f32 %v1567, %v1489
        %v1569 = vadd.f32 %v1568, %v1492
        %v1570 = vadd.f32 %v1569, %v1495
        %v1571 = vadd.f32 %v1570, %v1498
        %v1572 = vadd.f32 %v1571, %v1501
        %v1573 = vadd.f32 %v1572, %v1504
        %v1574 = vadd.f32 %v1573, %v1507
        %v1575 = vadd.f32 %v1574, %v1510
        %v1576 = vadd.f32 %v1575, %v1513
        %v1577 = vadd.f32 %v1576, %v1516
        %v1578 = vadd.f32 %v1577, %v1519
        %v1579 = vadd.f32 %v1578, %v1522
        %v1580 = vadd.f32 %v1579, %v1525
        %v1581 = vadd.f32 %v1580, %v1528
        %v1582 = vadd.f32 %v1581, %v1531
        %v1583 = vadd.f32 %v1582, %v1534
        %v1584 = vadd.f32 %v1583, %v1537
        %v1585 = vadd.f32 %v1584, %v1540
        %v1586 = vadd.f32 %v1585, %v1543
        %v1587 = vadd.f32 %v1586, %v1546
        %v1588 = vadd.f32 %v1587, %v1549
        %v1589 = vadd.f32 %v1588, %v1552
        %v1590 = vadd.f32 %v1589, %v1555
        %v1591 = vadd.f32 %v1590, %v1558
        %v1592 = vrot.slane %v1591, 4
        %v1593 = vadd.f32 %v1591, %v1592
        %v1594 = vrot.slane %v1593, 2
        %v1595 = vadd.f32 %v1593, %v1594
        %v1596 = vrot.slane %v1595, 1
        %v1597 = vadd.f32 %v1595, %v1596
        %v1598 = vadd.f32 %v1466, %v1469
        %v1599 = vadd.f32 %v1598, %v1472
        %v1600 = vadd.f32 %v1599, %v1475
        %v1601 = vadd.f32 %v1600, %v1478
        %v1602 = vadd.f32 %v1601, %v1481
        %v1603 = vadd.f32 %v1602, %v1484
        %v1604 = vadd.f32 %v1603, %v1487
        %v1605 = vadd.f32 %v1604, %v1490
        %v1606 = vadd.f32 %v1605, %v1493
        %v1607 = vadd.f32 %v1606, %v1496
        %v1608 = vadd.f32 %v1607, %v1499
        %v1609 = vadd.f32 %v1608, %v1502
        %v1610 = vadd.f32 %v1609, %v1505
        %v1611 = vadd.f32 %v1610, %v1508
        %v1612 = vadd.f32 %v1611, %v1511
        %v1613 = vadd.f32 %v1612, %v1514
        %v1614 = vadd.f32 %v1613, %v1517
        %v1615 = vadd.f32 %v1614, %v1520
        %v1616 = vadd.f32 %v1615, %v1523
        %v1617 = vadd.f32 %v1616, %v1526
        %v1618 = vadd.f32 %v1617, %v1529
        %v1619 = vadd.f32 %v1618, %v1532
        %v1620 = vadd.f32 %v1619, %v1535
        %v1621 = vadd.f32 %v1620, %v1538
        %v1622 = vadd.f32 %v1621, %v1541
        %v1623 = vadd.f32 %v1622, %v1544
        %v1624 = vadd.f32 %v1623, %v1547
        %v1625 = vadd.f32 %v1624, %v1550
        %v1626 = vadd.f32 %v1625, %v1553
        %v1627 = vadd.f32 %v1626, %v1556
        %v1628 = vadd.f32 %v1627, %v1559
        %v1629 = vrot.slane %v1628, 4
        %v1630 = vadd.f32 %v1628, %v1629
        %v1631 = vrot.slane %v1630, 2
        %v1632 = vadd.f32 %v1630, %v1631
        %v1633 = vrot.slane %v1632, 1
        %v1634 = vadd.f32 %v1632, %v1633
        %v1635 = vadd.f32 %v1467, %v1470
        %v1636 = vadd.f32 %v1635, %v1473
        %v1637 = vadd.f32 %v1636, %v1476
        %v1638 = vadd.f32 %v1637, %v1479
        %v1639 = vadd.f32 %v1638, %v1482
        %v1640 = vadd.f32 %v1639, %v1485
        %v1641 = vadd.f32 %v1640, %v1488
        %v1642 = vadd.f32 %v1641, %v1491
        %v1643 = vadd.f32 %v1642, %v1494
        %v1644 = vadd.f32 %v1643, %v1497
        %v1645 = vadd.f32 %v1644, %v1500
        %v1646 = vadd.f32 %v1645, %v1503
        %v1647 = vadd.f32 %v1646, %v1506
        %v1648 = vadd.f32 %v1647, %v1509
        %v1649 = vadd.f32 %v1648, %v1512
        %v1650 = vadd.f32 %v1649, %v1515
        %v1651 = vadd.f32 %v1650, %v1518
        %v1652 = vadd.f32 %v1651, %v1521
        %v1653 = vadd.f32 %v1652, %v1524
        %v1654 = vadd.f32 %v1653, %v1527
        %v1655 = vadd.f32 %v1654, %v1530
        %v1656 = vadd.f32 %v1655, %v1533
        %v1657 = vadd.f32 %v1656, %v1536
        %v1658 = vadd.f32 %v1657, %v1539
        %v1659 = vadd.f32 %v1658, %v1542
        %v1660 = vadd.f32 %v1659, %v1545
        %v1661 = vadd.f32 %v1660, %v1548
        %v1662 = vadd.f32 %v1661, %v1551
        %v1663 = vadd.f32 %v1662, %v1554
        %v1664 = vadd.f32 %v1663, %v1557
        %v1665 = vadd.f32 %v1664, %v1560
        %v1666 = vrot.slane %v1665, 4
        %v1667 = vadd.f32 %v1665, %v1666
        %v1668 = vrot.slane %v1667, 2
        %v1669 = vadd.f32 %v1667, %v1668
        %v1670 = vrot.slane %v1669, 1
        %v1671 = vadd.f32 %v1669, %v1670
        %v1672 = vsel %vm762, %v1390, %v1597
        %v1673 = vsel %vm762, %v1427, %v1634
        %v1674 = vsel %vm762, %v1464, %v1671
        %v1678 = vrot.slane %v1673, 6
        %v1679 = vrot.slane %v1674, 4
        %v1680 = vsel %vm360, %v1672, %v1678
        %vm1681 = vcmask 1043456
        %v1682 = vsel %vm1681, %v1680, %v1679
        %v1684 = vadd.f32 %v1353, %v1682
        %1685 = vst [vmem:[#allocation6] sm:$0x3f] %v1684
        %v1686 = vld [vmem:[#allocation7] sm:$0x3]
        %v1687 = vadd.f32 %v1236, %v1238
        %v1688 = vadd.f32 %v1687, %v1241
        %v1689 = vadd.f32 %v1688, %v1243
        %v1690 = vadd.f32 %v1689, %v1246
        %v1691 = vadd.f32 %v1690, %v1248
        %v1692 = vadd.f32 %v1691, %v1251
        %v1693 = vadd.f32 %v1692, %v1253
        %v1694 = vadd.f32 %v1693, %v1256
        %v1695 = vadd.f32 %v1694, %v1258
        %v1696 = vadd.f32 %v1695, %v1261
        %v1697 = vadd.f32 %v1696, %v1263
        %v1698 = vadd.f32 %v1697, %v1266
        %v1699 = vadd.f32 %v1698, %v1268
        %v1700 = vadd.f32 %v1699, %v1271
        %v1701 = vadd.f32 %v1700, %v1273
        %v1702 = vadd.f32 %v1701, %v1276
        %v1703 = vadd.f32 %v1702, %v1278
        %v1704 = vadd.f32 %v1703, %v1281
        %v1705 = vadd.f32 %v1704, %v1283
        %v1706 = vadd.f32 %v1705, %v1286
        %v1707 = vadd.f32 %v1706, %v1288
        %v1708 = vadd.f32 %v1707, %v1291
        %v1709 = vadd.f32 %v1708, %v1293
        %v1710 = vadd.f32 %v1709, %v1296
        %v1711 = vadd.f32 %v1710, %v1298
        %v1712 = vadd.f32 %v1711, %v1301
        %v1713 = vadd.f32 %v1712, %v1303
        %v1714 = vadd.f32 %v1713, %v1306
        %v1715 = vadd.f32 %v1714, %v1308
        %v1716 = vadd.f32 %v1715, %v1311
        %v1717 = vadd.f32 %v1716, %v1313
        %v1718 = vrot.slane %v1717, 4
        %v1719 = vadd.f32 %v1717, %v1718
        %v1720 = vrot.slane %v1719, 2
        %v1721 = vadd.f32 %v1719, %v1720
        %v1722 = vrot.slane %v1721, 1
        %v1723 = vadd.f32 %v1721, %v1722
        %v1724 = vmul.f32 %v1236, %v1236
        %v1725 = vmul.f32 %v1238, %v1238
        %v1726 = vmul.f32 %v1241, %v1241
        %v1727 = vmul.f32 %v1243, %v1243
        %v1728 = vmul.f32 %v1246, %v1246
        %v1729 = vmul.f32 %v1248, %v1248
        %v1730 = vmul.f32 %v1251, %v1251
        %v1731 = vmul.f32 %v1253, %v1253
        %v1732 = vmul.f32 %v1256, %v1256
        %v1733 = vmul.f32 %v1258, %v1258
        %v1734 = vmul.f32 %v1261, %v1261
        %v1735 = vmul.f32 %v1263, %v1263
        %v1736 = vmul.f32 %v1266, %v1266
        %v1737 = vmul.f32 %v1268, %v1268
        %v1738 = vmul.f32 %v1271, %v1271
        %v1739 = vmul.f32 %v1273, %v1273
        %v1740 = vmul.f32 %v1276, %v1276
        %v1741 = vmul.f32 %v1278, %v1278
        %v1742 = vmul.f32 %v1281, %v1281
        %v1743 = vmul.f32 %v1283, %v1283
        %v1744 = vmul.f32 %v1286, %v1286
        %v1745 = vmul.f32 %v1288, %v1288
        %v1746 = vmul.f32 %v1291, %v1291
        %v1747 = vmul.f32 %v1293, %v1293
        %v1748 = vmul.f32 %v1296, %v1296
        %v1749 = vmul.f32 %v1298, %v1298
        %v1750 = vmul.f32 %v1301, %v1301
        %v1751 = vmul.f32 %v1303, %v1303
        %v1752 = vmul.f32 %v1306, %v1306
        %v1753 = vmul.f32 %v1308, %v1308
        %v1754 = vmul.f32 %v1311, %v1311
        %v1755 = vmul.f32 %v1313, %v1313
        %v1756 = vadd.f32 %v1724, %v1725
        %v1757 = vadd.f32 %v1756, %v1726
        %v1758 = vadd.f32 %v1757, %v1727
        %v1759 = vadd.f32 %v1758, %v1728
        %v1760 = vadd.f32 %v1759, %v1729
        %v1761 = vadd.f32 %v1760, %v1730
        %v1762 = vadd.f32 %v1761, %v1731
        %v1763 = vadd.f32 %v1762, %v1732
        %v1764 = vadd.f32 %v1763, %v1733
        %v1765 = vadd.f32 %v1764, %v1734
        %v1766 = vadd.f32 %v1765, %v1735
        %v1767 = vadd.f32 %v1766, %v1736
        %v1768 = vadd.f32 %v1767, %v1737
        %v1769 = vadd.f32 %v1768, %v1738
        %v1770 = vadd.f32 %v1769, %v1739
        %v1771 = vadd.f32 %v1770, %v1740
        %v1772 = vadd.f32 %v1771, %v1741
        %v1773 = vadd.f32 %v1772, %v1742
        %v1774 = vadd.f32 %v1773, %v1743
        %v1775 = vadd.f32 %v1774, %v1744
        %v1776 = vadd.f32 %v1775, %v1745
        %v1777 = vadd.f32 %v1776, %v1746
        %v1778 = vadd.f32 %v1777, %v1747
        %v1779 = vadd.f32 %v1778, %v1748
        %v1780 = vadd.f32 %v1779, %v1749
        %v1781 = vadd.f32 %v1780, %v1750
        %v1782 = vadd.f32 %v1781, %v1751
        %v1783 = vadd.f32 %v1782, %v1752
        %v1784 = vadd.f32 %v1783, %v1753
        %v1785 = vadd.f32 %v1784, %v1754
        %v1786 = vadd.f32 %v1785, %v1755
        %v1787 = vrot.slane %v1786, 4
        %v1788 = vadd.f32 %v1786, %v1787
        %v1789 = vrot.slane %v1788, 2
        %v1790 = vadd.f32 %v1788, %v1789
        %v1791 = vrot.slane %v1790, 1
        %v1792 = vadd.f32 %v1790, %v1791
        %v1793 = vsel %vm762, %v1723, %v1792
        %v1794 = vadd.f32 %v1686, %v1793
        %1795 = vst [vmem:[#allocation7] sm:$0x3] %v1794
        %s1796 = sand.u32 %s101, 1
        %s1797 = scalar_lea.sflag [#allocation3], %s1796
        %s1798 = sand.u32 %s101, 1
        %s1799 = smul.addr %s1798, 768
        %s1800 = scalar_lea.vmem [#allocation2], %s1799
        %s1801 = sand.u32 %s25, 1
        %s1802 = scalar_lea.sflag [#allocation5], %s1801
        %s1803 = sand.u32 %s127, 1
        %s1804 = smul.addr %s1803, 256
        %s1805 = scalar_lea.vmem [#allocation4], %s1804
        // Predicated region
        $region37: #{tpu_custom_call.1} parent=31 // pred_check
          %p1806 = pneg %p111
        $region38: #{tpu_custom_call.1} parent=31 // pred_check_branch
          %1808 = sbr.rel (%p1806) target = $region40
        $region39: #{tpu_custom_call.1} parent=31 // pred_region
          %1810 = vsyncadd %s1797, 0
          %s1811 = smul.addr %s25, 96
          %s1812 = smul.addr %s1811, 8
          %s1813 = scalar_lea.hbm %s3, %s1812
          %s1814 = sshll.u32 %s1800, 4
          %s1815 = int_to_ptr.vmem [resolvable:$true] %s1814
          %s1816 = sshll.u32 %s1813, 4
          %s1817 = int_to_ptr.hbm [resolvable:$true] %s1816
          %1822 = dma.vmem_to_hbm [thread:$0]  %s1815, 12288, %s1817, %s1797, 384, 384, 24
        $region40: #{tpu_custom_call.1} parent=31 // pred_fallthru
          _
        // Predicated region
        $region41: #{tpu_custom_call.1} parent=31 // pred_check
          %p1823 = pneg %p137
        $region42: #{tpu_custom_call.1} parent=31 // pred_check_branch
          %1825 = sbr.rel (%p1823) target = $region44
        $region43: #{tpu_custom_call.1} parent=31 // pred_region
          %1827 = vsyncadd %s1802, 0
          %s1828 = smul.addr %s25, 32
          %s1829 = smul.addr %s1828, 8
          %s1830 = scalar_lea.hbm %s4, %s1829
          %s1831 = sshll.u32 %s1805, 4
          %s1832 = int_to_ptr.vmem [resolvable:$true] %s1831
          %s1833 = sshll.u32 %s1830, 4
          %s1834 = int_to_ptr.hbm [resolvable:$true] %s1833
          %1839 = dma.vmem_to_hbm [thread:$0]  %s1832, 4096, %s1834, %s1802, 128, 128, 8
        $region44: #{tpu_custom_call.1} parent=31 // pred_fallthru
          _
        // Predicated region
        $region45: #{tpu_custom_call.1} parent=31 // pred_check
          %p1840 = pneg %p158
        $region46: #{tpu_custom_call.1} parent=31 // pred_check_branch
          %1842 = sbr.rel (%p1840) target = $region48
        $region47: #{tpu_custom_call.1} parent=31 // pred_region
          %1844 = vsyncadd [#allocation5], 0
          %s1846 = sshll.u32 [#allocation6], 4
          %s1847 = int_to_ptr.vmem [resolvable:$true] %s1846
          %s1848 = sshll.u32 %s5, 4
          %s1849 = int_to_ptr.hbm [resolvable:$true] %s1848
          %1851 = dma.vmem_to_hbm [thread:$0]  %s1847, 96, %s1849, [#allocation5]
        $region48: #{tpu_custom_call.1} parent=31 // pred_fallthru
          _
        // Predicated region
        $region49: #{tpu_custom_call.1} parent=31 // pred_check
          %p1852 = pneg %p179
        $region50: #{tpu_custom_call.1} parent=31 // pred_check_branch
          %1854 = sbr.rel (%p1852) target = $region52
        $region51: #{tpu_custom_call.1} parent=31 // pred_region
          %1856 = vsyncadd [#allocation8], 0
          %s1858 = sshll.u32 [#allocation7], 4
          %s1859 = int_to_ptr.vmem [resolvable:$true] %s1858
          %s1860 = sshll.u32 %s6, 4
          %s1861 = int_to_ptr.hbm [resolvable:$true] %s1860
          %1863 = dma.vmem_to_hbm [thread:$0]  %s1859, 32, %s1861, [#allocation8]
        $region52: #{tpu_custom_call.1} parent=31 // pred_fallthru
          _
        // Predicated region
        $region53: #{tpu_custom_call.1} parent=31 // pred_check
          %p1864 = pneg %p158
        $region54: #{tpu_custom_call.1} parent=31 // pred_check_branch
          %1866 = sbr.rel (%p1864) target = $region56
        $region55: #{tpu_custom_call.1} parent=31 // pred_region
          %1868 = dma.done [#allocation5], 96
        $region56: #{tpu_custom_call.1} parent=31 // pred_fallthru
          _
        // Predicated region
        $region57: #{tpu_custom_call.1} parent=31 // pred_check
          %p1869 = pneg %p179
        $region58: #{tpu_custom_call.1} parent=31 // pred_check_branch
          %1871 = sbr.rel (%p1869) target = $region60
        $region59: #{tpu_custom_call.1} parent=31 // pred_region
          %1873 = dma.done [#allocation8], 32
        $region60: #{tpu_custom_call.1} parent=31 // pred_fallthru
          _
      $region32: #{tpu_custom_call.1} parent=5 // pred_fallthru
        _
      %p1874 = scmp.le.s32.totalorder 2, %s20
      // Predicated region
      $region61: #{tpu_custom_call.1} parent=5 // pred_check
        %p1875 = pneg %p1874
      $region62: #{tpu_custom_call.1} parent=5 // pred_check_branch
        %1877 = sbr.rel (%p1875) target = $region64
      $region63: #{tpu_custom_call.1} parent=5 // pred_region
        %s1878 = ssub.s32 %s20, 2
        // Predicated region
        $region65: #{tpu_custom_call.1} parent=63 // pred_check
          %p1879 = pneg %p117
        $region66: #{tpu_custom_call.1} parent=63 // pred_check_branch
          %1881 = sbr.rel (%p1879) target = $region68
        $region67: #{tpu_custom_call.1} parent=63 // pred_region
          %s1882 = sand.u32 %s102, 1
          %s1883 = scalar_lea.sflag [#allocation3], %s1882
          %s1884 = sand.u32 %s102, 1
          %s1885 = smul.addr %s1884, 768
          %s1886 = scalar_lea.vmem [#allocation2], %s1885
          %1888 = dma.done %s1883, 12288
        $region68: #{tpu_custom_call.1} parent=63 // pred_fallthru
          _
        // Predicated region
        $region69: #{tpu_custom_call.1} parent=63 // pred_check
          %p1889 = pneg %p143
        $region70: #{tpu_custom_call.1} parent=63 // pred_check_branch
          %1891 = sbr.rel (%p1889) target = $region72
        $region71: #{tpu_custom_call.1} parent=63 // pred_region
          %s1892 = sand.u32 %s26, 1
          %s1893 = scalar_lea.sflag [#allocation5], %s1892
          %s1894 = sand.u32 %s128, 1
          %s1895 = smul.addr %s1894, 256
          %s1896 = scalar_lea.vmem [#allocation4], %s1895
          %1898 = dma.done %s1893, 4096
        $region72: #{tpu_custom_call.1} parent=63 // pred_fallthru
          _
      $region64: #{tpu_custom_call.1} parent=5 // pred_fallthru
        _
    $region6: #{tpu_custom_call.1} parent=1 // loop_footer
      %s24 = sadd.s32 1, %s20
    $region7: #{tpu_custom_call.1} parent=1 // loop_footer_branch
      %19 = sbr.rel target = $region3
    $region8: #{tpu_custom_call.1} parent=1 // loop_exit
      _
    %1899 = vsyncpa [#allocation3], 1
    %s1900 = scalar_lea.sflag [#allocation3], 1
    %1901 = vsyncpa %s1900, 1
    %1902 = vsyncpa [#allocation5], 1
    %s1903 = scalar_lea.sflag [#allocation5], 1
    %1904 = vsyncpa %s1903, 1
    %1905 = vsyncpa [#allocation8], 1

</llo_original>
